<compile_context>
chip_gen: v7x
topology: tpu7x:2x2x1
jax: 0.10.0
libtpu: 0.0.40
codegen_flags: <defaults>
</compile_context>

<pallas_src>
import jax
import jax.numpy as jnp
from jax import lax
from jax.experimental import pallas as pl
from jax.experimental.pallas import tpu as pltpu


def _gru_kernel(x_ref, wi_ref, wh_ref, out_ref):
    """Whole GRU forward (h0 = 0, zero biases) in one kernel invocation.

    x_ref  : (T, Bp, D)     time-major, batch padded to a multiple of 8
    wi_ref : (D, 3*Hp)      fused+lane-padded input weights  [Wr|Wz|Wn]
    wh_ref : (Hp, 3*Hp)     fused+lane-padded hidden weights [Wr|Wz|Wn]
    out_ref: (Bp, Hp)       final hidden state (padded; wrapper slices)
    """
    T, Bp, D = x_ref.shape
    Hp = wh_ref.shape[0]                     # 128-lane padded gate width
    G = wh_ref.shape[1]                      # 3 * Hp
    mxu_dt = wi_ref.dtype                    # bf16 by default; f32 escape hatch

    # ---- Phase 1 (non-recurrent): hoisted input projections --------------
    # One (T*Bp, D) @ (D, 3*Hp) MXU pass for every timestep's gate
    # pre-activations; the serial loop only does the hidden matmul.
    x_all = x_ref[...].reshape(T * Bp, D).astype(mxu_dt)
    gi = jnp.dot(x_all, wi_ref[...], preferred_element_type=jnp.float32)
    gi = gi.reshape(T, Bp, G)                # (T, Bp, 3*Hp), f32, time-major

    wh = wh_ref[...]                         # stationary (Hp, 3*Hp)

    # ---- Phase 2: the recurrence; h lives in vregs as a loop carry --------
    h = jnp.zeros((Bp, Hp), jnp.float32)     # one (8,128) vreg, f32 carry
    for t in range(T):                       # static T -> full unroll
        gi_t = gi[t]                         # (Bp, 3*Hp) contiguous sublanes
        gh = jnp.dot(h.astype(mxu_dt), wh,
                     preferred_element_type=jnp.float32)   # (Bp, 3*Hp)
        s = gi_t + gh
        # 128-lane-aligned slices -> whole-vreg selects, no lane shifts.
        r = jax.nn.sigmoid(s[:, 0:Hp])
        z = jax.nn.sigmoid(s[:, Hp:2 * Hp])
        n = jnp.tanh(gi_t[:, 2 * Hp:3 * Hp] + r * gh[:, 2 * Hp:3 * Hp])
        h = (1.0 - z) * n + z * h            # f32 gate math (v5e-safe)

    out_ref[...] = h.astype(out_ref.dtype)   # lane-dense (Bp, Hp) store


def _pad_gate_cols(w, H, Hp):
    """(K, 3H) fused gate weights -> (K, 3*Hp) with each gate block padded
    to a full 128-lane boundary with zero columns."""
    blocks = [jnp.pad(w[:, g * H:(g + 1) * H], ((0, 0), (0, Hp - H)))
              for g in range(3)]
    return jnp.concatenate(blocks, axis=1)


def question_embedding_forward(x, params, *, mxu_dtype=jnp.bfloat16):
    """x: (B, T, D) batch_first.  Returns the final hidden state (B, H)."""
    B, T, D = x.shape
    wi = params["wi"]                                   # (D, 3H)
    wh = params["wh"]                                   # (H, 3H)
    H = wh.shape[0]

    Hp = max(128, ((H + 127) // 128) * 128)             # lane-pad per gate
    Bp = max(8, ((B + 7) // 8) * 8)                     # sublane-pad batch

    # Pad gate blocks to 128 lanes (zero columns) and wh rows to Hp (zero
    # rows) so the kernel's per-step slices are whole vregs and the padded
    # hidden lanes stay exactly zero.
    wi_p = _pad_gate_cols(wi, H, Hp)                    # (D, 3*Hp)
    wh_p = jnp.pad(_pad_gate_cols(wh, H, Hp),
                   ((0, Hp - H), (0, 0)))               # (Hp, 3*Hp)

    if mxu_dtype is not None:
        # Default bf16 MXU operands: single MXU pass per step, half the
        # weight DMA bytes.  Accumulation and the h carry remain f32.
        wi_p = wi_p.astype(mxu_dtype)
        wh_p = wh_p.astype(mxu_dtype)

    # Zero-pad batch and go time-major so gi[t] is a contiguous sublane block.
    x_p = jnp.pad(x, ((0, Bp - B), (0, 0), (0, 0)))     # (Bp, T, D)
    x_tbd = jnp.transpose(x_p, (1, 0, 2))               # (T, Bp, D)

    flops = 2 * (Bp * T) * D * (3 * Hp) + 2 * T * Bp * Hp * (3 * Hp)
    transcendentals = 3 * T * Bp * Hp                   # 2 sigmoid + 1 tanh
    bytes_accessed = (x_tbd.size * x_tbd.dtype.itemsize
                      + wi_p.size * wi_p.dtype.itemsize
                      + wh_p.size * wh_p.dtype.itemsize
                      + Bp * Hp * x.dtype.itemsize)

    vmem_spec = pl.BlockSpec(memory_space=pltpu.MemorySpace.VMEM)
    out_full = pl.pallas_call(
        _gru_kernel,
        out_shape=jax.ShapeDtypeStruct((Bp, Hp), x.dtype),
        in_specs=[vmem_spec, vmem_spec, vmem_spec],
        out_specs=vmem_spec,
        cost_estimate=pl.CostEstimate(
            flops=flops,
            transcendentals=transcendentals,
            bytes_accessed=bytes_accessed,
        ),
    )(x_tbd, wi_p, wh_p)

    return out_full[:B, :H]                             # un-pad in the wrapper


def _xavier_uniform(key, shape):
    fan_out, fan_in = shape
    bound = jnp.sqrt(6.0 / (fan_in + fan_out))
    return jax.random.uniform(key, shape, jnp.float32, -bound, bound)


def make_params(key, input_dim, hidden_dim):
    """Fused GRU parameters (per-gate xavier init, zero biases).

    PyTorch GRU layout is (gate, out, in) with gate order (r, z, n); we store
    the transposed per-gate blocks concatenated along the output axis so the
    kernel does x @ [Wr|Wz|Wn] directly.
    """
    keys = jax.random.split(key, 6)
    w_ir = _xavier_uniform(keys[0], (hidden_dim, input_dim))
    w_iz = _xavier_uniform(keys[1], (hidden_dim, input_dim))
    w_in = _xavier_uniform(keys[2], (hidden_dim, input_dim))
    w_hr = _xavier_uniform(keys[3], (hidden_dim, hidden_dim))
    w_hz = _xavier_uniform(keys[4], (hidden_dim, hidden_dim))
    w_hn = _xavier_uniform(keys[5], (hidden_dim, hidden_dim))
    wi = jnp.concatenate([w_ir.T, w_iz.T, w_in.T], axis=1)  # (D, 3H)
    wh = jnp.concatenate([w_hr.T, w_hz.T, w_hn.T], axis=1)  # (H, 3H)
    return dict(wi=wi, wh=wh)


def gru_reference(x, params):
    """Pure-JAX reference (PyTorch GRU equations, zero biases, h0 = 0)."""
    B, T, D = x.shape
    wi, wh = params["wi"], params["wh"]
    H = wh.shape[0]

    def step(h, x_t):
        gi = x_t @ wi
        gh = h @ wh
        r = jax.nn.sigmoid(gi[:, 0:H] + gh[:, 0:H])
        z = jax.nn.sigmoid(gi[:, H:2 * H] + gh[:, H:2 * H])
        n = jnp.tanh(gi[:, 2 * H:] + r * gh[:, 2 * H:])
        return (1.0 - z) * n + z * h, None

    h0 = jnp.zeros((B, H), jnp.float32)
    h_final, _ = lax.scan(step, h0, jnp.transpose(x, (1, 0, 2)))
    return h_final


if __name__ == "__main__":
    # config: input_dim=32, hidden_dim=32, num_layers=1, GRU, unidirectional
    B, T, D, H = 2, 8, 32, 32

    key = jax.random.PRNGKey(0)
    k_x, k_p = jax.random.split(key)
    x = jax.random.normal(k_x, (B, T, D), jnp.float32)
    params = make_params(k_p, D, H)

    ref = gru_reference(x, params)

    # Exact f32 path: must match the reference tightly (validates the padded
    # layout is mathematically identical).
    out_f32 = question_embedding_forward(x, params, mxu_dtype=None)
    out_f32 = jax.block_until_ready(out_f32)
    assert out_f32.shape == (B, H)
    assert jnp.allclose(out_f32, ref, atol=1e-5, rtol=1e-5), "f32 mismatch vs reference"

    # Default path: bf16 MXU operands, f32 accumulation + f32 h carry, so only
    # operand rounding differs -> loose tolerance.
    out = question_embedding_forward(x, params)
    out = jax.block_until_ready(out)
    assert out.shape == (B, H)
    assert jnp.allclose(out, ref, atol=5e-2, rtol=5e-2), "bf16 mismatch vs reference"

    print("KERNEL_OK")
</pallas_src>

<mosaic_0001>
module attributes {stable_mosaic.version = 11 : i64} {
  func.func @_gru_kernel(%arg0: memref<8x8x32xf32, #tpu.memory_space<vmem>>, %arg1: memref<32x384xf32, #tpu.memory_space<vmem>>, %arg2: memref<128x384xf32, #tpu.memory_space<vmem>>, %arg3: memref<8x128xf32, #tpu.memory_space<vmem>>) attributes {dimension_semantics = [], scalar_prefetch = 0 : i64, scratch_operands = 0 : i64, tpu.core_type = #tpu.core_type<tc>} {
    %c0 = arith.constant 0 : index
    %c0_0 = arith.constant 0 : index
    %c0_1 = arith.constant 0 : index
    %0 = vector.load %arg0[%c0, %c0_0, %c0_1] : memref<8x8x32xf32, #tpu.memory_space<vmem>>, vector<8x8x32xf32>
    %1 = vector.shape_cast %0 : vector<8x8x32xf32> to vector<64x32xf32>
    %c0_2 = arith.constant 0 : index
    %c0_3 = arith.constant 0 : index
    %2 = vector.load %arg1[%c0_2, %c0_3] : memref<32x384xf32, #tpu.memory_space<vmem>>, vector<32x384xf32>
    %cst = arith.constant dense<0.000000e+00> : vector<64x384xf32>
    %3 = tpu.matmul %1, %2, %cst {dimension_numbers = #tpu.dot_dimension_numbers<[1], [0], [0], [1], [0, 0, 1, 1], [], []>} : vector<64x32xf32>, vector<32x384xf32>, vector<64x384xf32> -> vector<64x384xf32>
    %4 = vector.shape_cast %3 : vector<64x384xf32> to vector<8x8x384xf32>
    %c0_4 = arith.constant 0 : index
    %c0_5 = arith.constant 0 : index
    %5 = vector.load %arg2[%c0_4, %c0_5] : memref<128x384xf32, #tpu.memory_space<vmem>>, vector<128x384xf32>
    %cst_6 = arith.constant 0.000000e+00 : f32
    %6 = vector.broadcast %cst_6 : f32 to vector<8x128xf32>
    %7 = vector.extract_strided_slice %4 {offsets = [0, 0, 0], sizes = [1, 8, 384], strides = [1, 1, 1]} : vector<8x8x384xf32> to vector<1x8x384xf32>
    %8 = vector.shape_cast %7 : vector<1x8x384xf32> to vector<8x384xf32>
    %cst_7 = arith.constant dense<0.000000e+00> : vector<8x384xf32>
    %9 = tpu.matmul %6, %5, %cst_7 {dimension_numbers = #tpu.dot_dimension_numbers<[1], [0], [0], [1], [0, 0, 1, 1], [], []>} : vector<8x128xf32>, vector<128x384xf32>, vector<8x384xf32> -> vector<8x384xf32>
    %10 = arith.addf %8, %9 : vector<8x384xf32>
    %11 = vector.extract_strided_slice %10 {offsets = [0, 0], sizes = [8, 128], strides = [1, 1]} : vector<8x384xf32> to vector<8x128xf32>
    %12 = arith.negf %11 : vector<8x128xf32>
    %13 = math.exp %12 : vector<8x128xf32>
    %cst_8 = arith.constant 1.000000e+00 : f32
    %14 = vector.broadcast %cst_8 : f32 to vector<8x128xf32>
    %15 = arith.addf %14, %13 : vector<8x128xf32>
    %16 = arith.divf %14, %15 : vector<8x128xf32>
    %17 = vector.extract_strided_slice %10 {offsets = [0, 128], sizes = [8, 128], strides = [1, 1]} : vector<8x384xf32> to vector<8x128xf32>
    %18 = arith.negf %17 : vector<8x128xf32>
    %19 = math.exp %18 : vector<8x128xf32>
    %cst_9 = arith.constant 1.000000e+00 : f32
    %20 = vector.broadcast %cst_9 : f32 to vector<8x128xf32>
    %21 = arith.addf %20, %19 : vector<8x128xf32>
    %22 = arith.divf %20, %21 : vector<8x128xf32>
    %23 = vector.extract_strided_slice %8 {offsets = [0, 256], sizes = [8, 128], strides = [1, 1]} : vector<8x384xf32> to vector<8x128xf32>
    %24 = vector.extract_strided_slice %9 {offsets = [0, 256], sizes = [8, 128], strides = [1, 1]} : vector<8x384xf32> to vector<8x128xf32>
    %25 = arith.mulf %16, %24 : vector<8x128xf32>
    %26 = arith.addf %23, %25 : vector<8x128xf32>
    %27 = math.tanh %26 : vector<8x128xf32>
    %cst_10 = arith.constant 1.000000e+00 : f32
    %28 = vector.broadcast %cst_10 : f32 to vector<8x128xf32>
    %29 = arith.subf %28, %22 : vector<8x128xf32>
    %30 = arith.mulf %29, %27 : vector<8x128xf32>
    %31 = arith.mulf %22, %6 : vector<8x128xf32>
    %32 = arith.addf %30, %31 : vector<8x128xf32>
    %33 = vector.extract_strided_slice %4 {offsets = [1, 0, 0], sizes = [1, 8, 384], strides = [1, 1, 1]} : vector<8x8x384xf32> to vector<1x8x384xf32>
    %34 = vector.shape_cast %33 : vector<1x8x384xf32> to vector<8x384xf32>
    %cst_11 = arith.constant dense<0.000000e+00> : vector<8x384xf32>
    %35 = tpu.matmul %32, %5, %cst_11 {dimension_numbers = #tpu.dot_dimension_numbers<[1], [0], [0], [1], [0, 0, 1, 1], [], []>} : vector<8x128xf32>, vector<128x384xf32>, vector<8x384xf32> -> vector<8x384xf32>
    %36 = arith.addf %34, %35 : vector<8x384xf32>
    %37 = vector.extract_strided_slice %36 {offsets = [0, 0], sizes = [8, 128], strides = [1, 1]} : vector<8x384xf32> to vector<8x128xf32>
    %38 = arith.negf %37 : vector<8x128xf32>
    %39 = math.exp %38 : vector<8x128xf32>
    %cst_12 = arith.constant 1.000000e+00 : f32
    %40 = vector.broadcast %cst_12 : f32 to vector<8x128xf32>
    %41 = arith.addf %40, %39 : vector<8x128xf32>
    %42 = arith.divf %40, %41 : vector<8x128xf32>
    %43 = vector.extract_strided_slice %36 {offsets = [0, 128], sizes = [8, 128], strides = [1, 1]} : vector<8x384xf32> to vector<8x128xf32>
    %44 = arith.negf %43 : vector<8x128xf32>
    %45 = math.exp %44 : vector<8x128xf32>
    %cst_13 = arith.constant 1.000000e+00 : f32
    %46 = vector.broadcast %cst_13 : f32 to vector<8x128xf32>
    %47 = arith.addf %46, %45 : vector<8x128xf32>
    %48 = arith.divf %46, %47 : vector<8x128xf32>
    %49 = vector.extract_strided_slice %34 {offsets = [0, 256], sizes = [8, 128], strides = [1, 1]} : vector<8x384xf32> to vector<8x128xf32>
    %50 = vector.extract_strided_slice %35 {offsets = [0, 256], sizes = [8, 128], strides = [1, 1]} : vector<8x384xf32> to vector<8x128xf32>
    %51 = arith.mulf %42, %50 : vector<8x128xf32>
    %52 = arith.addf %49, %51 : vector<8x128xf32>
    %53 = math.tanh %52 : vector<8x128xf32>
    %cst_14 = arith.constant 1.000000e+00 : f32
    %54 = vector.broadcast %cst_14 : f32 to vector<8x128xf32>
    %55 = arith.subf %54, %48 : vector<8x128xf32>
    %56 = arith.mulf %55, %53 : vector<8x128xf32>
    %57 = arith.mulf %48, %32 : vector<8x128xf32>
    %58 = arith.addf %56, %57 : vector<8x128xf32>
    %59 = vector.extract_strided_slice %4 {offsets = [2, 0, 0], sizes = [1, 8, 384], strides = [1, 1, 1]} : vector<8x8x384xf32> to vector<1x8x384xf32>
    %60 = vector.shape_cast %59 : vector<1x8x384xf32> to vector<8x384xf32>
    %cst_15 = arith.constant dense<0.000000e+00> : vector<8x384xf32>
    %61 = tpu.matmul %58, %5, %cst_15 {dimension_numbers = #tpu.dot_dimension_numbers<[1], [0], [0], [1], [0, 0, 1, 1], [], []>} : vector<8x128xf32>, vector<128x384xf32>, vector<8x384xf32> -> vector<8x384xf32>
    %62 = arith.addf %60, %61 : vector<8x384xf32>
    %63 = vector.extract_strided_slice %62 {offsets = [0, 0], sizes = [8, 128], strides = [1, 1]} : vector<8x384xf32> to vector<8x128xf32>
    %64 = arith.negf %63 : vector<8x128xf32>
    %65 = math.exp %64 : vector<8x128xf32>
    %cst_16 = arith.constant 1.000000e+00 : f32
    %66 = vector.broadcast %cst_16 : f32 to vector<8x128xf32>
    %67 = arith.addf %66, %65 : vector<8x128xf32>
    %68 = arith.divf %66, %67 : vector<8x128xf32>
    %69 = vector.extract_strided_slice %62 {offsets = [0, 128], sizes = [8, 128], strides = [1, 1]} : vector<8x384xf32> to vector<8x128xf32>
    %70 = arith.negf %69 : vector<8x128xf32>
    %71 = math.exp %70 : vector<8x128xf32>
    %cst_17 = arith.constant 1.000000e+00 : f32
    %72 = vector.broadcast %cst_17 : f32 to vector<8x128xf32>
    %73 = arith.addf %72, %71 : vector<8x128xf32>
    %74 = arith.divf %72, %73 : vector<8x128xf32>
    %75 = vector.extract_strided_slice %60 {offsets = [0, 256], sizes = [8, 128], strides = [1, 1]} : vector<8x384xf32> to vector<8x128xf32>
    %76 = vector.extract_strided_slice %61 {offsets = [0, 256], sizes = [8, 128], strides = [1, 1]} : vector<8x384xf32> to vector<8x128xf32>
    %77 = arith.mulf %68, %76 : vector<8x128xf32>
    %78 = arith.addf %75, %77 : vector<8x128xf32>
    %79 = math.tanh %78 : vector<8x128xf32>
    %cst_18 = arith.constant 1.000000e+00 : f32
    %80 = vector.broadcast %cst_18 : f32 to vector<8x128xf32>
    %81 = arith.subf %80, %74 : vector<8x128xf32>
    %82 = arith.mulf %81, %79 : vector<8x128xf32>
    %83 = arith.mulf %74, %58 : vector<8x128xf32>
    %84 = arith.addf %82, %83 : vector<8x128xf32>
    %85 = vector.extract_strided_slice %4 {offsets = [3, 0, 0], sizes = [1, 8, 384], strides = [1, 1, 1]} : vector<8x8x384xf32> to vector<1x8x384xf32>
    %86 = vector.shape_cast %85 : vector<1x8x384xf32> to vector<8x384xf32>
    %cst_19 = arith.constant dense<0.000000e+00> : vector<8x384xf32>
    %87 = tpu.matmul %84, %5, %cst_19 {dimension_numbers = #tpu.dot_dimension_numbers<[1], [0], [0], [1], [0, 0, 1, 1], [], []>} : vector<8x128xf32>, vector<128x384xf32>, vector<8x384xf32> -> vector<8x384xf32>
    %88 = arith.addf %86, %87 : vector<8x384xf32>
    %89 = vector.extract_strided_slice %88 {offsets = [0, 0], sizes = [8, 128], strides = [1, 1]} : vector<8x384xf32> to vector<8x128xf32>
    %90 = arith.negf %89 : vector<8x128xf32>
    %91 = math.exp %90 : vector<8x128xf32>
    %cst_20 = arith.constant 1.000000e+00 : f32
    %92 = vector.broadcast %cst_20 : f32 to vector<8x128xf32>
    %93 = arith.addf %92, %91 : vector<8x128xf32>
    %94 = arith.divf %92, %93 : vector<8x128xf32>
    %95 = vector.extract_strided_slice %88 {offsets = [0, 128], sizes = [8, 128], strides = [1, 1]} : vector<8x384xf32> to vector<8x128xf32>
    %96 = arith.negf %95 : vector<8x128xf32>
    %97 = math.exp %96 : vector<8x128xf32>
    %cst_21 = arith.constant 1.000000e+00 : f32
    %98 = vector.broadcast %cst_21 : f32 to vector<8x128xf32>
    %99 = arith.addf %98, %97 : vector<8x128xf32>
    %100 = arith.divf %98, %99 : vector<8x128xf32>
    %101 = vector.extract_strided_slice %86 {offsets = [0, 256], sizes = [8, 128], strides = [1, 1]} : vector<8x384xf32> to vector<8x128xf32>
    %102 = vector.extract_strided_slice %87 {offsets = [0, 256], sizes = [8, 128], strides = [1, 1]} : vector<8x384xf32> to vector<8x128xf32>
    %103 = arith.mulf %94, %102 : vector<8x128xf32>
    %104 = arith.addf %101, %103 : vector<8x128xf32>
    %105 = math.tanh %104 : vector<8x128xf32>
    %cst_22 = arith.constant 1.000000e+00 : f32
    %106 = vector.broadcast %cst_22 : f32 to vector<8x128xf32>
    %107 = arith.subf %106, %100 : vector<8x128xf32>
    %108 = arith.mulf %107, %105 : vector<8x128xf32>
    %109 = arith.mulf %100, %84 : vector<8x128xf32>
    %110 = arith.addf %108, %109 : vector<8x128xf32>
    %111 = vector.extract_strided_slice %4 {offsets = [4, 0, 0], sizes = [1, 8, 384], strides = [1, 1, 1]} : vector<8x8x384xf32> to vector<1x8x384xf32>
    %112 = vector.shape_cast %111 : vector<1x8x384xf32> to vector<8x384xf32>
    %cst_23 = arith.constant dense<0.000000e+00> : vector<8x384xf32>
    %113 = tpu.matmul %110, %5, %cst_23 {dimension_numbers = #tpu.dot_dimension_numbers<[1], [0], [0], [1], [0, 0, 1, 1], [], []>} : vector<8x128xf32>, vector<128x384xf32>, vector<8x384xf32> -> vector<8x384xf32>
    %114 = arith.addf %112, %113 : vector<8x384xf32>
    %115 = vector.extract_strided_slice %114 {offsets = [0, 0], sizes = [8, 128], strides = [1, 1]} : vector<8x384xf32> to vector<8x128xf32>
    %116 = arith.negf %115 : vector<8x128xf32>
    %117 = math.exp %116 : vector<8x128xf32>
    %cst_24 = arith.constant 1.000000e+00 : f32
    %118 = vector.broadcast %cst_24 : f32 to vector<8x128xf32>
    %119 = arith.addf %118, %117 : vector<8x128xf32>
    %120 = arith.divf %118, %119 : vector<8x128xf32>
    %121 = vector.extract_strided_slice %114 {offsets = [0, 128], sizes = [8, 128], strides = [1, 1]} : vector<8x384xf32> to vector<8x128xf32>
    %122 = arith.negf %121 : vector<8x128xf32>
    %123 = math.exp %122 : vector<8x128xf32>
    %cst_25 = arith.constant 1.000000e+00 : f32
    %124 = vector.broadcast %cst_25 : f32 to vector<8x128xf32>
    %125 = arith.addf %124, %123 : vector<8x128xf32>
    %126 = arith.divf %124, %125 : vector<8x128xf32>
    %127 = vector.extract_strided_slice %112 {offsets = [0, 256], sizes = [8, 128], strides = [1, 1]} : vector<8x384xf32> to vector<8x128xf32>
    %128 = vector.extract_strided_slice %113 {offsets = [0, 256], sizes = [8, 128], strides = [1, 1]} : vector<8x384xf32> to vector<8x128xf32>
    %129 = arith.mulf %120, %128 : vector<8x128xf32>
    %130 = arith.addf %127, %129 : vector<8x128xf32>
    %131 = math.tanh %130 : vector<8x128xf32>
    %cst_26 = arith.constant 1.000000e+00 : f32
    %132 = vector.broadcast %cst_26 : f32 to vector<8x128xf32>
    %133 = arith.subf %132, %126 : vector<8x128xf32>
    %134 = arith.mulf %133, %131 : vector<8x128xf32>
    %135 = arith.mulf %126, %110 : vector<8x128xf32>
    %136 = arith.addf %134, %135 : vector<8x128xf32>
    %137 = vector.extract_strided_slice %4 {offsets = [5, 0, 0], sizes = [1, 8, 384], strides = [1, 1, 1]} : vector<8x8x384xf32> to vector<1x8x384xf32>
    %138 = vector.shape_cast %137 : vector<1x8x384xf32> to vector<8x384xf32>
    %cst_27 = arith.constant dense<0.000000e+00> : vector<8x384xf32>
    %139 = tpu.matmul %136, %5, %cst_27 {dimension_numbers = #tpu.dot_dimension_numbers<[1], [0], [0], [1], [0, 0, 1, 1], [], []>} : vector<8x128xf32>, vector<128x384xf32>, vector<8x384xf32> -> vector<8x384xf32>
    %140 = arith.addf %138, %139 : vector<8x384xf32>
    %141 = vector.extract_strided_slice %140 {offsets = [0, 0], sizes = [8, 128], strides = [1, 1]} : vector<8x384xf32> to vector<8x128xf32>
    %142 = arith.negf %141 : vector<8x128xf32>
    %143 = math.exp %142 : vector<8x128xf32>
    %cst_28 = arith.constant 1.000000e+00 : f32
    %144 = vector.broadcast %cst_28 : f32 to vector<8x128xf32>
    %145 = arith.addf %144, %143 : vector<8x128xf32>
    %146 = arith.divf %144, %145 : vector<8x128xf32>
    %147 = vector.extract_strided_slice %140 {offsets = [0, 128], sizes = [8, 128], strides = [1, 1]} : vector<8x384xf32> to vector<8x128xf32>
    %148 = arith.negf %147 : vector<8x128xf32>
    %149 = math.exp %148 : vector<8x128xf32>
    %cst_29 = arith.constant 1.000000e+00 : f32
    %150 = vector.broadcast %cst_29 : f32 to vector<8x128xf32>
    %151 = arith.addf %150, %149 : vector<8x128xf32>
    %152 = arith.divf %150, %151 : vector<8x128xf32>
    %153 = vector.extract_strided_slice %138 {offsets = [0, 256], sizes = [8, 128], strides = [1, 1]} : vector<8x384xf32> to vector<8x128xf32>
    %154 = vector.extract_strided_slice %139 {offsets = [0, 256], sizes = [8, 128], strides = [1, 1]} : vector<8x384xf32> to vector<8x128xf32>
    %155 = arith.mulf %146, %154 : vector<8x128xf32>
    %156 = arith.addf %153, %155 : vector<8x128xf32>
    %157 = math.tanh %156 : vector<8x128xf32>
    %cst_30 = arith.constant 1.000000e+00 : f32
    %158 = vector.broadcast %cst_30 : f32 to vector<8x128xf32>
    %159 = arith.subf %158, %152 : vector<8x128xf32>
    %160 = arith.mulf %159, %157 : vector<8x128xf32>
    %161 = arith.mulf %152, %136 : vector<8x128xf32>
    %162 = arith.addf %160, %161 : vector<8x128xf32>
    %163 = vector.extract_strided_slice %4 {offsets = [6, 0, 0], sizes = [1, 8, 384], strides = [1, 1, 1]} : vector<8x8x384xf32> to vector<1x8x384xf32>
    %164 = vector.shape_cast %163 : vector<1x8x384xf32> to vector<8x384xf32>
    %cst_31 = arith.constant dense<0.000000e+00> : vector<8x384xf32>
    %165 = tpu.matmul %162, %5, %cst_31 {dimension_numbers = #tpu.dot_dimension_numbers<[1], [0], [0], [1], [0, 0, 1, 1], [], []>} : vector<8x128xf32>, vector<128x384xf32>, vector<8x384xf32> -> vector<8x384xf32>
    %166 = arith.addf %164, %165 : vector<8x384xf32>
    %167 = vector.extract_strided_slice %166 {offsets = [0, 0], sizes = [8, 128], strides = [1, 1]} : vector<8x384xf32> to vector<8x128xf32>
    %168 = arith.negf %167 : vector<8x128xf32>
    %169 = math.exp %168 : vector<8x128xf32>
    %cst_32 = arith.constant 1.000000e+00 : f32
    %170 = vector.broadcast %cst_32 : f32 to vector<8x128xf32>
    %171 = arith.addf %170, %169 : vector<8x128xf32>
    %172 = arith.divf %170, %171 : vector<8x128xf32>
    %173 = vector.extract_strided_slice %166 {offsets = [0, 128], sizes = [8, 128], strides = [1, 1]} : vector<8x384xf32> to vector<8x128xf32>
    %174 = arith.negf %173 : vector<8x128xf32>
    %175 = math.exp %174 : vector<8x128xf32>
    %cst_33 = arith.constant 1.000000e+00 : f32
    %176 = vector.broadcast %cst_33 : f32 to vector<8x128xf32>
    %177 = arith.addf %176, %175 : vector<8x128xf32>
    %178 = arith.divf %176, %177 : vector<8x128xf32>
    %179 = vector.extract_strided_slice %164 {offsets = [0, 256], sizes = [8, 128], strides = [1, 1]} : vector<8x384xf32> to vector<8x128xf32>
    %180 = vector.extract_strided_slice %165 {offsets = [0, 256], sizes = [8, 128], strides = [1, 1]} : vector<8x384xf32> to vector<8x128xf32>
    %181 = arith.mulf %172, %180 : vector<8x128xf32>
    %182 = arith.addf %179, %181 : vector<8x128xf32>
    %183 = math.tanh %182 : vector<8x128xf32>
    %cst_34 = arith.constant 1.000000e+00 : f32
    %184 = vector.broadcast %cst_34 : f32 to vector<8x128xf32>
    %185 = arith.subf %184, %178 : vector<8x128xf32>
    %186 = arith.mulf %185, %183 : vector<8x128xf32>
    %187 = arith.mulf %178, %162 : vector<8x128xf32>
    %188 = arith.addf %186, %187 : vector<8x128xf32>
    %189 = vector.extract_strided_slice %4 {offsets = [7, 0, 0], sizes = [1, 8, 384], strides = [1, 1, 1]} : vector<8x8x384xf32> to vector<1x8x384xf32>
    %190 = vector.shape_cast %189 : vector<1x8x384xf32> to vector<8x384xf32>
    %cst_35 = arith.constant dense<0.000000e+00> : vector<8x384xf32>
    %191 = tpu.matmul %188, %5, %cst_35 {dimension_numbers = #tpu.dot_dimension_numbers<[1], [0], [0], [1], [0, 0, 1, 1], [], []>} : vector<8x128xf32>, vector<128x384xf32>, vector<8x384xf32> -> vector<8x384xf32>
    %192 = arith.addf %190, %191 : vector<8x384xf32>
    %193 = vector.extract_strided_slice %192 {offsets = [0, 0], sizes = [8, 128], strides = [1, 1]} : vector<8x384xf32> to vector<8x128xf32>
    %194 = arith.negf %193 : vector<8x128xf32>
    %195 = math.exp %194 : vector<8x128xf32>
    %cst_36 = arith.constant 1.000000e+00 : f32
    %196 = vector.broadcast %cst_36 : f32 to vector<8x128xf32>
    %197 = arith.addf %196, %195 : vector<8x128xf32>
    %198 = arith.divf %196, %197 : vector<8x128xf32>
    %199 = vector.extract_strided_slice %192 {offsets = [0, 128], sizes = [8, 128], strides = [1, 1]} : vector<8x384xf32> to vector<8x128xf32>
    %200 = arith.negf %199 : vector<8x128xf32>
    %201 = math.exp %200 : vector<8x128xf32>
    %cst_37 = arith.constant 1.000000e+00 : f32
    %202 = vector.broadcast %cst_37 : f32 to vector<8x128xf32>
    %203 = arith.addf %202, %201 : vector<8x128xf32>
    %204 = arith.divf %202, %203 : vector<8x128xf32>
    %205 = vector.extract_strided_slice %190 {offsets = [0, 256], sizes = [8, 128], strides = [1, 1]} : vector<8x384xf32> to vector<8x128xf32>
    %206 = vector.extract_strided_slice %191 {offsets = [0, 256], sizes = [8, 128], strides = [1, 1]} : vector<8x384xf32> to vector<8x128xf32>
    %207 = arith.mulf %198, %206 : vector<8x128xf32>
    %208 = arith.addf %205, %207 : vector<8x128xf32>
    %209 = math.tanh %208 : vector<8x128xf32>
    %cst_38 = arith.constant 1.000000e+00 : f32
    %210 = vector.broadcast %cst_38 : f32 to vector<8x128xf32>
    %211 = arith.subf %210, %204 : vector<8x128xf32>
    %212 = arith.mulf %211, %209 : vector<8x128xf32>
    %213 = arith.mulf %204, %188 : vector<8x128xf32>
    %214 = arith.addf %212, %213 : vector<8x128xf32>
    %c0_39 = arith.constant 0 : index
    %c0_40 = arith.constant 0 : index
    %215 = vector.load %arg3[%c0_39, %c0_40] : memref<8x128xf32, #tpu.memory_space<vmem>>, vector<8x128xf32>
    tpu.vector_store %arg3[%c0_39, %c0_40], %214 {strides = array<i32>} : memref<8x128xf32, #tpu.memory_space<vmem>>, vector<8x128xf32>,
    return
  }
}

</mosaic_0001>

<llo_original>
// kernel: tpu_custom_call.1
$region0: #{tpu_custom_call.1}
  #allocation0 [shape = 'u32[]', space=smem, size = 0x4, offset = 0x4, fixed_abs, tag = 'smem constant byte address 0x4 - core index']
  #allocation1 [shape = 'u32[144,128]{1,0:T(1,128)}', space=vmem, size = 0x12000, scoped, tag = 'internal scratch']
  %s0 = inlined_call_operand.hbm [shape: f32[8,8,32], index: 0, kind: input, shape index: {}]
  %s1 = inlined_call_operand.hbm [shape: f32[32,384], index: 1, kind: input, shape index: {}]
  %s2 = inlined_call_operand.hbm [shape: f32[128,384], index: 2, kind: input, shape index: {}]
  %s3 = inlined_call_operand.hbm [shape: f32[8,128], index: 3, kind: output, shape index: {}]
  %s4 = sld [smem:[#allocation0]]
  $region34: #{tpu_custom_call.1} parent=0
    _
  %s6 = ssub.s32 1, %s4
  %s7 = scalar_select 0, %s6, %s4
  $region1: #{tpu_custom_call.1} parent=0
    #allocation2 [shape = 'u8[32768]{0}', space=vmem, size = 0x8000, scoped, tag = 'input window, operand 0, single buffered']
    #allocation3 [shape = 's32[1]{0}', space=sflag, size = 0x4, scoped, tag = 'scoped memory for tpu_custom_call.1']
    #allocation4 [shape = 's32[1]{0}', space=sflag, size = 0x4, scoped, tag = 'scoped memory for tpu_custom_call.1']
    #allocation5 [shape = 'u8[49152]{0}', space=vmem, size = 0xc000, scoped, tag = 'input window, operand 1, single buffered']
    #allocation6 [shape = 's32[1]{0}', space=sflag, size = 0x4, scoped, tag = 'scoped memory for tpu_custom_call.1']
    #allocation7 [shape = 'u8[196608]{0}', space=vmem, size = 0x30000, scoped, tag = 'input window, operand 2, single buffered']
    #allocation8 [shape = 'u8[4096]{0}', space=vmem, size = 0x1000, scoped, tag = 'output window, operand 0, single buffered']
    %8 = vsyncpa [#allocation3], 0
    %9 = vsyncpa [#allocation6], 0
    %10 = vsyncpa [#allocation4], 0
    // Predicated region
    $region2: #{tpu_custom_call.1} parent=1 // pred_check
      _
    $region3: #{tpu_custom_call.1} parent=1 // pred_check_branch
      %12 = sbr.rel (0) target = $region5
    $region4: #{tpu_custom_call.1} parent=1 // pred_region
      %s14 = ssub.s32 1024, 1024
      %15 = vsyncadd [#allocation3], %s14
      %s16 = sshll.u32 [#allocation2], 4
      %s17 = int_to_ptr.vmem [resolvable:$true] %s16
      %22 = dma.hbm_to_vmem [thread:$0]  %s0, 1024, %s17, [#allocation3], 128, 128, 8
    $region5: #{tpu_custom_call.1} parent=1 // pred_fallthru
      _
    // Predicated region
    $region6: #{tpu_custom_call.1} parent=1 // pred_check
      _
    $region7: #{tpu_custom_call.1} parent=1 // pred_check_branch
      %24 = sbr.rel (0) target = $region9
    $region8: #{tpu_custom_call.1} parent=1 // pred_region
      %s26 = ssub.s32 1536, 1536
      %27 = vsyncadd [#allocation6], %s26
      %s28 = sshll.u32 [#allocation5], 4
      %s29 = int_to_ptr.vmem [resolvable:$true] %s28
      %34 = dma.hbm_to_vmem [thread:$0]  %s1, 1536, %s29, [#allocation6], 384, 384, 24
    $region9: #{tpu_custom_call.1} parent=1 // pred_fallthru
      _
    // Predicated region
    $region10: #{tpu_custom_call.1} parent=1 // pred_check
      _
    $region11: #{tpu_custom_call.1} parent=1 // pred_check_branch
      %36 = sbr.rel (0) target = $region13
    $region12: #{tpu_custom_call.1} parent=1 // pred_region
      %s38 = ssub.s32 6144, 6144
      %39 = vsyncadd [#allocation6], %s38
      %s40 = sshll.u32 [#allocation7], 4
      %s41 = int_to_ptr.vmem [resolvable:$true] %s40
      %46 = dma.hbm_to_vmem [thread:$0]  %s2, 6144, %s41, [#allocation6], 384, 384, 24
    $region13: #{tpu_custom_call.1} parent=1 // pred_fallthru
      _
    // Predicated region
    $region14: #{tpu_custom_call.1} parent=1 // pred_check
      _
    $region15: #{tpu_custom_call.1} parent=1 // pred_check_branch
      %48 = sbr.rel (0) target = $region17
    $region16: #{tpu_custom_call.1} parent=1 // pred_region
      %49 = dma.done [#allocation3], 1024
    $region17: #{tpu_custom_call.1} parent=1 // pred_fallthru
      _
    // Predicated region
    $region18: #{tpu_custom_call.1} parent=1 // pred_check
      _
    $region19: #{tpu_custom_call.1} parent=1 // pred_check_branch
      %51 = sbr.rel (0) target = $region21
    $region20: #{tpu_custom_call.1} parent=1 // pred_region
      %52 = dma.done [#allocation6], 1536
    $region21: #{tpu_custom_call.1} parent=1 // pred_fallthru
      _
    // Predicated region
    $region22: #{tpu_custom_call.1} parent=1 // pred_check
      _
    $region23: #{tpu_custom_call.1} parent=1 // pred_check_branch
      %54 = sbr.rel (0) target = $region25
    $region24: #{tpu_custom_call.1} parent=1 // pred_region
      %55 = dma.done [#allocation6], 6144
    $region25: #{tpu_custom_call.1} parent=1 // pred_fallthru
      _
    %v56 = vld [vmem:[#allocation2] sm:$0xff]
    %v57 = vld [vmem:[#allocation2 + $0x8] sm:$0xff]
    %v58 = vld [vmem:[#allocation2 + $0x10] sm:$0xff]
    %v59 = vld [vmem:[#allocation2 + $0x18] sm:$0xff]
    %v60 = vld [vmem:[#allocation2 + $0x20] sm:$0xff]
    %v61 = vld [vmem:[#allocation2 + $0x28] sm:$0xff]
    %v62 = vld [vmem:[#allocation2 + $0x30] sm:$0xff]
    %v63 = vld [vmem:[#allocation2 + $0x38] sm:$0xff]
    %v64 = vld [vmem:[#allocation5] sm:$0xff]
    %v65 = vld [vmem:[#allocation5 + $0x8] sm:$0xff]
    %v66 = vld [vmem:[#allocation5 + $0x10] sm:$0xff]
    %v67 = vld [vmem:[#allocation5 + $0x18] sm:$0xff]
    %v68 = vld [vmem:[#allocation5 + $0x20] sm:$0xff]
    %v69 = vld [vmem:[#allocation5 + $0x28] sm:$0xff]
    %v70 = vld [vmem:[#allocation5 + $0x30] sm:$0xff]
    %v71 = vld [vmem:[#allocation5 + $0x38] sm:$0xff]
    %v72 = vld [vmem:[#allocation5 + $0x40] sm:$0xff]
    %v73 = vld [vmem:[#allocation5 + $0x48] sm:$0xff]
    %v74 = vld [vmem:[#allocation5 + $0x50] sm:$0xff]
    %v75 = vld [vmem:[#allocation5 + $0x58] sm:$0xff]
    %vm76 = vcmask 261120
    %v78 = vsel %vm76, %v56, 0
    %v81 = vsel %vm76, %v57, 0
    %v84 = vsel %vm76, %v58, 0
    %v87 = vsel %vm76, %v59, 0
    %v90 = vsel %vm76, %v60, 0
    %v93 = vsel %vm76, %v61, 0
    %v96 = vsel %vm76, %v62, 0
    %v99 = vsel %vm76, %v63, 0
    %101 = vmatprep.subr.mxu0 %v65
    %102 = vmatpush1.msra.mxu0 %v64
    %103 = vmatprep.subr.mxu0 %v68
    %104 = vmatpush1.msra.mxu0 %v67
    %105 = vmatprep.subr.mxu0 %v71
    %106 = vmatpush1.msra.mxu0 %v70
    %107 = vmatprep.subr.mxu0 %v74
    %108 = vmatpush1.msra.mxu0 %v73
    %109 = vmatprep.subr.mxu0 0.0
    %110 = vmatpush1.msra.mxu0 0.0
    %111 = vmatprep.subr.mxu0 0.0
    %112 = vmatpush1.msra.mxu0 0.0
    %113 = vmatprep.subr.mxu0 0.0
    %114 = vmatpush1.msra.mxu0 0.0
    %115 = vmatprep.subr.mxu0 0.0
    %116 = vmatpush1.msra.mxu0 0.0
    %117 = vmatprep.subr.mxu0 0.0
    %118 = vmatpush1.msra.mxu0 0.0
    %119 = vmatprep.subr.mxu0 0.0
    %120 = vmatpush1.msra.mxu0 0.0
    %121 = vmatprep.subr.mxu0 0.0
    %122 = vmatpush1.msra.mxu0 0.0
    %123 = vmatprep.subr.mxu0 0.0
    %124 = vmatpush1.msra.mxu0 0.0
    %125 = vmatprep.subr.mxu0 0.0
    %126 = vmatpush1.msra.mxu0 0.0
    %127 = vmatprep.subr.mxu0 0.0
    %128 = vmatpush1.msra.mxu0 0.0
    %129 = vmatprep.subr.mxu0 0.0
    %130 = vmatpush1.msra.mxu0 0.0
    %131 = vmatprep.subr.mxu0 0.0
    %132 = vmatpush1.msra.mxu0 0.0
    %133 = vmatprep.subr.mxu0 0.0
    %134 = vmatpush1.msra.mxu0 0.0
    %135 = vmatprep.subr.mxu0 0.0
    %136 = vmatpush1.msra.mxu0 0.0
    %137 = vmatprep.subr.mxu0 0.0
    %138 = vmatpush1.msra.mxu0 0.0
    %139 = vmatprep.subr.mxu0 0.0
    %140 = vmatpush1.msra.mxu0 0.0
    %141 = vmatprep.subr.mxu0 0.0
    %142 = vmatpush1.msra.mxu0 0.0
    %143 = vmatprep.subr.mxu0 0.0
    %144 = vmatpush1.msra.mxu0 0.0
    %145 = vmatprep.subr.mxu0 0.0
    %146 = vmatpush1.msra.mxu0 0.0
    %147 = vmatprep.subr.mxu0 0.0
    %148 = vmatpush1.msra.mxu0 0.0
    %149 = vmatprep.subr.mxu0 0.0
    %150 = vmatpush1.msra.mxu0 0.0
    %151 = vmatprep.subr.mxu0 0.0
    %152 = vmatpush1.msra.mxu0 0.0
    %153 = vmatprep.subr.mxu0 0.0
    %154 = vmatpush1.msra.mxu0 0.0
    %155 = vmatprep.subr.mxu0 0.0
    %156 = vmatpush1.msra.mxu0 0.0
    %157 = vmatprep.subr.mxu0 0.0
    %158 = vmatpush1.msra.mxu0 0.0
    %159 = vmatprep.subr.mxu0 0.0
    %160 = vmatpush1.msra.mxu0 0.0
    %161 = vmatprep.subr.mxu0 0.0
    %162 = vmatpush1.msra.mxu0 0.0
    %163 = vmatprep.subr.mxu0 0.0
    %164 = vmatpush1.msra.mxu0 0.0
    %165 = vmatprep.mubr.f32.mxu0 0.0
    %166 = vmatmul.mubr.f32.gmra.mrb[0].mxu0 %v78
    %v167 = vpop.f32.mrb[0].mxu0
    %v168 = vadd.f32 0.0, %v167
    %v169 = vpop.f32.mrb[0].mxu0
    %v170 = vadd.f32 0.0, %v169
    %171 = vmatprep.mubr.f32.mxu0 0.0
    %172 = vmatmul.mubr.f32.gmra.mrb[0].mxu0 %v81
    %v173 = vpop.f32.mrb[0].mxu0
    %v174 = vadd.f32 0.0, %v173
    %v175 = vpop.f32.mrb[0].mxu0
    %v176 = vadd.f32 0.0, %v175
    %177 = vmatprep.mubr.f32.mxu0 0.0
    %178 = vmatmul.mubr.f32.gmra.mrb[0].mxu0 %v84
    %v179 = vpop.f32.mrb[0].mxu0
    %v180 = vadd.f32 0.0, %v179
    %v181 = vpop.f32.mrb[0].mxu0
    %v182 = vadd.f32 0.0, %v181
    %183 = vmatprep.mubr.f32.mxu0 0.0
    %184 = vmatmul.mubr.f32.gmra.mrb[0].mxu0 %v87
    %v185 = vpop.f32.mrb[0].mxu0
    %v186 = vadd.f32 0.0, %v185
    %v187 = vpop.f32.mrb[0].mxu0
    %v188 = vadd.f32 0.0, %v187
    %189 = vmatprep.mubr.f32.mxu0 0.0
    %190 = vmatmul.mubr.f32.gmra.mrb[0].mxu0 %v90
    %v191 = vpop.f32.mrb[0].mxu0
    %v192 = vadd.f32 0.0, %v191
    %v193 = vpop.f32.mrb[0].mxu0
    %v194 = vadd.f32 0.0, %v193
    %195 = vmatprep.mubr.f32.mxu0 0.0
    %196 = vmatmul.mubr.f32.gmra.mrb[0].mxu0 %v93
    %v197 = vpop.f32.mrb[0].mxu0
    %v198 = vadd.f32 0.0, %v197
    %v199 = vpop.f32.mrb[0].mxu0
    %v200 = vadd.f32 0.0, %v199
    %201 = vmatprep.mubr.f32.mxu0 0.0
    %202 = vmatmul.mubr.f32.gmra.mrb[0].mxu0 %v96
    %v203 = vpop.f32.mrb[0].mxu0
    %v204 = vadd.f32 0.0, %v203
    %v205 = vpop.f32.mrb[0].mxu0
    %v206 = vadd.f32 0.0, %v205
    %207 = vmatprep.mubr.f32.mxu0 0.0
    %208 = vmatmul.mubr.f32.gmra.mrb[0].mxu0 %v99
    %v209 = vpop.f32.mrb[0].mxu0
    %v210 = vadd.f32 0.0, %v209
    %v211 = vpop.f32.mrb[0].mxu0
    %v212 = vadd.f32 0.0, %v211
    %213 = vdwg.mxu0
    %214 = vmatprep.subr.mxu0 0.0
    %215 = vmatpush1.msra.mxu0 %v66
    %216 = vmatprep.subr.mxu0 0.0
    %217 = vmatpush1.msra.mxu0 %v69
    %218 = vmatprep.subr.mxu0 0.0
    %219 = vmatpush1.msra.mxu0 %v72
    %220 = vmatprep.subr.mxu0 0.0
    %221 = vmatpush1.msra.mxu0 %v75
    %222 = vmatprep.subr.mxu0 0.0
    %223 = vmatpush1.msra.mxu0 0.0
    %224 = vmatprep.subr.mxu0 0.0
    %225 = vmatpush1.msra.mxu0 0.0
    %226 = vmatprep.subr.mxu0 0.0
    %227 = vmatpush1.msra.mxu0 0.0
    %228 = vmatprep.subr.mxu0 0.0
    %229 = vmatpush1.msra.mxu0 0.0
    %230 = vmatprep.subr.mxu0 0.0
    %231 = vmatpush1.msra.mxu0 0.0
    %232 = vmatprep.subr.mxu0 0.0
    %233 = vmatpush1.msra.mxu0 0.0
    %234 = vmatprep.subr.mxu0 0.0
    %235 = vmatpush1.msra.mxu0 0.0
    %236 = vmatprep.subr.mxu0 0.0
    %237 = vmatpush1.msra.mxu0 0.0
    %238 = vmatprep.subr.mxu0 0.0
    %239 = vmatpush1.msra.mxu0 0.0
    %240 = vmatprep.subr.mxu0 0.0
    %241 = vmatpush1.msra.mxu0 0.0
    %242 = vmatprep.subr.mxu0 0.0
    %243 = vmatpush1.msra.mxu0 0.0
    %244 = vmatprep.subr.mxu0 0.0
    %245 = vmatpush1.msra.mxu0 0.0
    %246 = vmatprep.subr.mxu0 0.0
    %247 = vmatpush1.msra.mxu0 0.0
    %248 = vmatprep.subr.mxu0 0.0
    %249 = vmatpush1.msra.mxu0 0.0
    %250 = vmatprep.subr.mxu0 0.0
    %251 = vmatpush1.msra.mxu0 0.0
    %252 = vmatprep.subr.mxu0 0.0
    %253 = vmatpush1.msra.mxu0 0.0
    %254 = vmatprep.subr.mxu0 0.0
    %255 = vmatpush1.msra.mxu0 0.0
    %256 = vmatprep.subr.mxu0 0.0
    %257 = vmatpush1.msra.mxu0 0.0
    %258 = vmatprep.subr.mxu0 0.0
    %259 = vmatpush1.msra.mxu0 0.0
    %260 = vmatprep.subr.mxu0 0.0
    %261 = vmatpush1.msra.mxu0 0.0
    %262 = vmatprep.subr.mxu0 0.0
    %263 = vmatpush1.msra.mxu0 0.0
    %264 = vmatprep.subr.mxu0 0.0
    %265 = vmatpush1.msra.mxu0 0.0
    %266 = vmatprep.subr.mxu0 0.0
    %267 = vmatpush1.msra.mxu0 0.0
    %268 = vmatprep.subr.mxu0 0.0
    %269 = vmatpush1.msra.mxu0 0.0
    %270 = vmatprep.subr.mxu0 0.0
    %271 = vmatpush1.msra.mxu0 0.0
    %272 = vmatprep.subr.mxu0 0.0
    %273 = vmatpush1.msra.mxu0 0.0
    %274 = vmatprep.subr.mxu0 0.0
    %275 = vmatpush1.msra.mxu0 0.0
    %276 = vmatprep.subr.mxu0 0.0
    %277 = vmatpush1.msra.mxu0 0.0
    %278 = vmatprep.mubr.f32.mxu0 0.0
    %279 = vmatmul.mubr.f32.gmra.mrb[0].mxu0 %v78
    %v280 = vpop.f32.mrb[0].mxu0
    %v281 = vadd.f32 0.0, %v280
    %v282 = vpop.f32.mrb[0].mxu0
    %283 = vmatprep.mubr.f32.mxu0 0.0
    %284 = vmatmul.mubr.f32.gmra.mrb[0].mxu0 %v81
    %v285 = vpop.f32.mrb[0].mxu0
    %v286 = vadd.f32 0.0, %v285
    %v287 = vpop.f32.mrb[0].mxu0
    %288 = vmatprep.mubr.f32.mxu0 0.0
    %289 = vmatmul.mubr.f32.gmra.mrb[0].mxu0 %v84
    %v290 = vpop.f32.mrb[0].mxu0
    %v291 = vadd.f32 0.0, %v290
    %v292 = vpop.f32.mrb[0].mxu0
    %293 = vmatprep.mubr.f32.mxu0 0.0
    %294 = vmatmul.mubr.f32.gmra.mrb[0].mxu0 %v87
    %v295 = vpop.f32.mrb[0].mxu0
    %v296 = vadd.f32 0.0, %v295
    %v297 = vpop.f32.mrb[0].mxu0
    %298 = vmatprep.mubr.f32.mxu0 0.0
    %299 = vmatmul.mubr.f32.gmra.mrb[0].mxu0 %v90
    %v300 = vpop.f32.mrb[0].mxu0
    %v301 = vadd.f32 0.0, %v300
    %v302 = vpop.f32.mrb[0].mxu0
    %303 = vmatprep.mubr.f32.mxu0 0.0
    %304 = vmatmul.mubr.f32.gmra.mrb[0].mxu0 %v93
    %v305 = vpop.f32.mrb[0].mxu0
    %v306 = vadd.f32 0.0, %v305
    %v307 = vpop.f32.mrb[0].mxu0
    %308 = vmatprep.mubr.f32.mxu0 0.0
    %309 = vmatmul.mubr.f32.gmra.mrb[0].mxu0 %v96
    %v310 = vpop.f32.mrb[0].mxu0
    %v311 = vadd.f32 0.0, %v310
    %v312 = vpop.f32.mrb[0].mxu0
    %313 = vmatprep.mubr.f32.mxu0 0.0
    %314 = vmatmul.mubr.f32.gmra.mrb[0].mxu0 %v99
    %v315 = vpop.f32.mrb[0].mxu0
    %v316 = vadd.f32 0.0, %v315
    %v317 = vpop.f32.mrb[0].mxu0
    %318 = vdwg.mxu0
    %v319 = vld [vmem:[#allocation7] sm:$0xff]
    %v320 = vld [vmem:[#allocation7 + $0x8] sm:$0xff]
    %v321 = vld [vmem:[#allocation7 + $0x10] sm:$0xff]
    %v322 = vld [vmem:[#allocation7 + $0x18] sm:$0xff]
    %v323 = vld [vmem:[#allocation7 + $0x20] sm:$0xff]
    %v324 = vld [vmem:[#allocation7 + $0x28] sm:$0xff]
    %v325 = vld [vmem:[#allocation7 + $0x30] sm:$0xff]
    %v326 = vld [vmem:[#allocation7 + $0x38] sm:$0xff]
    %v327 = vld [vmem:[#allocation7 + $0x40] sm:$0xff]
    %v328 = vld [vmem:[#allocation7 + $0x48] sm:$0xff]
    %v329 = vld [vmem:[#allocation7 + $0x50] sm:$0xff]
    %v330 = vld [vmem:[#allocation7 + $0x58] sm:$0xff]
    %v331 = vld [vmem:[#allocation7 + $0x60] sm:$0xff]
    %v332 = vld [vmem:[#allocation7 + $0x68] sm:$0xff]
    %v333 = vld [vmem:[#allocation7 + $0x70] sm:$0xff]
    %v334 = vld [vmem:[#allocation7 + $0x78] sm:$0xff]
    %v335 = vld [vmem:[#allocation7 + $0x80] sm:$0xff]
    %v336 = vld [vmem:[#allocation7 + $0x88] sm:$0xff]
    %v337 = vld [vmem:[#allocation7 + $0x90] sm:$0xff]
    %v338 = vld [vmem:[#allocation7 + $0x98] sm:$0xff]
    %v339 = vld [vmem:[#allocation7 + $0xa0] sm:$0xff]
    %v340 = vld [vmem:[#allocation7 + $0xa8] sm:$0xff]
    %v341 = vld [vmem:[#allocation7 + $0xb0] sm:$0xff]
    %v342 = vld [vmem:[#allocation7 + $0xb8] sm:$0xff]
    %v343 = vld [vmem:[#allocation7 + $0xc0] sm:$0xff]
    %v344 = vld [vmem:[#allocation7 + $0xc8] sm:$0xff]
    %v345 = vld [vmem:[#allocation7 + $0xd0] sm:$0xff]
    %v346 = vld [vmem:[#allocation7 + $0xd8] sm:$0xff]
    %v347 = vld [vmem:[#allocation7 + $0xe0] sm:$0xff]
    %v348 = vld [vmem:[#allocation7 + $0xe8] sm:$0xff]
    %v349 = vld [vmem:[#allocation7 + $0xf0] sm:$0xff]
    %v350 = vld [vmem:[#allocation7 + $0xf8] sm:$0xff]
    %v351 = vld [vmem:[#allocation7 + $0x100] sm:$0xff]
    %v352 = vld [vmem:[#allocation7 + $0x108] sm:$0xff]
    %v353 = vld [vmem:[#allocation7 + $0x110] sm:$0xff]
    %v354 = vld [vmem:[#allocation7 + $0x118] sm:$0xff]
    %v355 = vld [vmem:[#allocation7 + $0x120] sm:$0xff]
    %v356 = vld [vmem:[#allocation7 + $0x128] sm:$0xff]
    %v357 = vld [vmem:[#allocation7 + $0x130] sm:$0xff]
    %v358 = vld [vmem:[#allocation7 + $0x138] sm:$0xff]
    %v359 = vld [vmem:[#allocation7 + $0x140] sm:$0xff]
    %v360 = vld [vmem:[#allocation7 + $0x148] sm:$0xff]
    %v361 = vld [vmem:[#allocation7 + $0x150] sm:$0xff]
    %v362 = vld [vmem:[#allocation7 + $0x158] sm:$0xff]
    %v363 = vld [vmem:[#allocation7 + $0x160] sm:$0xff]
    %v364 = vld [vmem:[#allocation7 + $0x168] sm:$0xff]
    %v365 = vld [vmem:[#allocation7 + $0x170] sm:$0xff]
    %v366 = vld [vmem:[#allocation7 + $0x178] sm:$0xff]
    %367 = vmatprep.subr.mxu0 %v320
    %368 = vmatpush1.msra.mxu0 %v319
    %369 = vmatprep.subr.mxu0 %v323
    %370 = vmatpush1.msra.mxu0 %v322
    %371 = vmatprep.subr.mxu0 %v326
    %372 = vmatpush1.msra.mxu0 %v325
    %373 = vmatprep.subr.mxu0 %v329
    %374 = vmatpush1.msra.mxu0 %v328
    %375 = vmatprep.subr.mxu0 %v332
    %376 = vmatpush1.msra.mxu0 %v331
    %377 = vmatprep.subr.mxu0 %v335
    %378 = vmatpush1.msra.mxu0 %v334
    %379 = vmatprep.subr.mxu0 %v338
    %380 = vmatpush1.msra.mxu0 %v337
    %381 = vmatprep.subr.mxu0 %v341
    %382 = vmatpush1.msra.mxu0 %v340
    %383 = vmatprep.subr.mxu0 %v344
    %384 = vmatpush1.msra.mxu0 %v343
    %385 = vmatprep.subr.mxu0 %v347
    %386 = vmatpush1.msra.mxu0 %v346
    %387 = vmatprep.subr.mxu0 %v350
    %388 = vmatpush1.msra.mxu0 %v349
    %389 = vmatprep.subr.mxu0 %v353
    %390 = vmatpush1.msra.mxu0 %v352
    %391 = vmatprep.subr.mxu0 %v356
    %392 = vmatpush1.msra.mxu0 %v355
    %393 = vmatprep.subr.mxu0 %v359
    %394 = vmatpush1.msra.mxu0 %v358
    %395 = vmatprep.subr.mxu0 %v362
    %396 = vmatpush1.msra.mxu0 %v361
    %397 = vmatprep.subr.mxu0 %v365
    %398 = vmatpush1.msra.mxu0 %v364
    %399 = vmatprep.subr.mxu0 0.0
    %400 = vmatpush1.msra.mxu0 0.0
    %401 = vmatprep.subr.mxu0 0.0
    %402 = vmatpush1.msra.mxu0 0.0
    %403 = vmatprep.subr.mxu0 0.0
    %404 = vmatpush1.msra.mxu0 0.0
    %405 = vmatprep.subr.mxu0 0.0
    %406 = vmatpush1.msra.mxu0 0.0
    %407 = vmatprep.subr.mxu0 0.0
    %408 = vmatpush1.msra.mxu0 0.0
    %409 = vmatprep.subr.mxu0 0.0
    %410 = vmatpush1.msra.mxu0 0.0
    %411 = vmatprep.subr.mxu0 0.0
    %412 = vmatpush1.msra.mxu0 0.0
    %413 = vmatprep.subr.mxu0 0.0
    %414 = vmatpush1.msra.mxu0 0.0
    %415 = vmatprep.subr.mxu0 0.0
    %416 = vmatpush1.msra.mxu0 0.0
    %417 = vmatprep.subr.mxu0 0.0
    %418 = vmatpush1.msra.mxu0 0.0
    %419 = vmatprep.subr.mxu0 0.0
    %420 = vmatpush1.msra.mxu0 0.0
    %421 = vmatprep.subr.mxu0 0.0
    %422 = vmatpush1.msra.mxu0 0.0
    %423 = vmatprep.subr.mxu0 0.0
    %424 = vmatpush1.msra.mxu0 0.0
    %425 = vmatprep.subr.mxu0 0.0
    %426 = vmatpush1.msra.mxu0 0.0
    %427 = vmatprep.subr.mxu0 0.0
    %428 = vmatpush1.msra.mxu0 0.0
    %429 = vmatprep.subr.mxu0 0.0
    %430 = vmatpush1.msra.mxu0 0.0
    %431 = vmatprep.mubr.f32.mxu0 0.0
    %432 = vmatmul.mubr.f32.gmra.mrb[0].mxu0 0.0
    %v433 = vpop.f32.mrb[0].mxu0
    %v434 = vadd.f32 0.0, %v433
    %v435 = vpop.f32.mrb[0].mxu0
    %v436 = vadd.f32 0.0, %v435
    %437 = vdwg.mxu0
    %438 = vmatprep.subr.mxu0 0.0
    %439 = vmatpush1.msra.mxu0 %v321
    %440 = vmatprep.subr.mxu0 0.0
    %441 = vmatpush1.msra.mxu0 %v324
    %442 = vmatprep.subr.mxu0 0.0
    %443 = vmatpush1.msra.mxu0 %v327
    %444 = vmatprep.subr.mxu0 0.0
    %445 = vmatpush1.msra.mxu0 %v330
    %446 = vmatprep.subr.mxu0 0.0
    %447 = vmatpush1.msra.mxu0 %v333
    %448 = vmatprep.subr.mxu0 0.0
    %449 = vmatpush1.msra.mxu0 %v336
    %450 = vmatprep.subr.mxu0 0.0
    %451 = vmatpush1.msra.mxu0 %v339
    %452 = vmatprep.subr.mxu0 0.0
    %453 = vmatpush1.msra.mxu0 %v342
    %454 = vmatprep.subr.mxu0 0.0
    %455 = vmatpush1.msra.mxu0 %v345
    %456 = vmatprep.subr.mxu0 0.0
    %457 = vmatpush1.msra.mxu0 %v348
    %458 = vmatprep.subr.mxu0 0.0
    %459 = vmatpush1.msra.mxu0 %v351
    %460 = vmatprep.subr.mxu0 0.0
    %461 = vmatpush1.msra.mxu0 %v354
    %462 = vmatprep.subr.mxu0 0.0
    %463 = vmatpush1.msra.mxu0 %v357
    %464 = vmatprep.subr.mxu0 0.0
    %465 = vmatpush1.msra.mxu0 %v360
    %466 = vmatprep.subr.mxu0 0.0
    %467 = vmatpush1.msra.mxu0 %v363
    %468 = vmatprep.subr.mxu0 0.0
    %469 = vmatpush1.msra.mxu0 %v366
    %470 = vmatprep.subr.mxu0 0.0
    %471 = vmatpush1.msra.mxu0 0.0
    %472 = vmatprep.subr.mxu0 0.0
    %473 = vmatpush1.msra.mxu0 0.0
    %474 = vmatprep.subr.mxu0 0.0
    %475 = vmatpush1.msra.mxu0 0.0
    %476 = vmatprep.subr.mxu0 0.0
    %477 = vmatpush1.msra.mxu0 0.0
    %478 = vmatprep.subr.mxu0 0.0
    %479 = vmatpush1.msra.mxu0 0.0
    %480 = vmatprep.subr.mxu0 0.0
    %481 = vmatpush1.msra.mxu0 0.0
    %482 = vmatprep.subr.mxu0 0.0
    %483 = vmatpush1.msra.mxu0 0.0
    %484 = vmatprep.subr.mxu0 0.0
    %485 = vmatpush1.msra.mxu0 0.0
    %486 = vmatprep.subr.mxu0 0.0
    %487 = vmatpush1.msra.mxu0 0.0
    %488 = vmatprep.subr.mxu0 0.0
    %489 = vmatpush1.msra.mxu0 0.0
    %490 = vmatprep.subr.mxu0 0.0
    %491 = vmatpush1.msra.mxu0 0.0
    %492 = vmatprep.subr.mxu0 0.0
    %493 = vmatpush1.msra.mxu0 0.0
    %494 = vmatprep.subr.mxu0 0.0
    %495 = vmatpush1.msra.mxu0 0.0
    %496 = vmatprep.subr.mxu0 0.0
    %497 = vmatpush1.msra.mxu0 0.0
    %498 = vmatprep.subr.mxu0 0.0
    %499 = vmatpush1.msra.mxu0 0.0
    %500 = vmatprep.subr.mxu0 0.0
    %501 = vmatpush1.msra.mxu0 0.0
    %502 = vmatprep.mubr.f32.mxu0 0.0
    %503 = vmatmul.mubr.f32.gmra.mrb[0].mxu0 0.0
    %v504 = vpop.f32.mrb[0].mxu0
    %v505 = vadd.f32 0.0, %v504
    %v506 = vpop.f32.mrb[0].mxu0
    %507 = vdwg.mxu0
    %v508 = vadd.f32 %v168, %v434
    %v509 = vadd.f32 %v170, %v436
    %v510 = vxor.u32 %v508, 2147483648
    %v511 = vmul.f32 %v510, 1.442695
    %v512 = vpow.pop %v511
    %v513 = vadd.f32 %v512, 1.0
    %v514 = vrcp.pop %v513
    %v515 = vmul.f32 1.0, %v514
    %v516 = vxor.u32 %v509, 2147483648
    %v517 = vmul.f32 %v516, 1.442695
    %v518 = vpow.pop %v517
    %v519 = vadd.f32 %v518, 1.0
    %v520 = vrcp.pop %v519
    %v521 = vmul.f32 1.0, %v520
    %v522 = vmul.f32 %v515, %v505
    %v523 = vadd.f32 %v281, %v522
    %v524 = vtanh.pop %v523
    %v525 = vsub.f32 1.0, %v521
    %v526 = vmul.f32 %v525, %v524
    %v527 = vmul.f32 %v521, 0.0
    %v528 = vadd.f32 %v526, %v527
    %529 = vmatprep.subr.mxu0 %v320
    %530 = vmatpush1.msra.mxu0 %v319
    %531 = vmatprep.subr.mxu0 %v323
    %532 = vmatpush1.msra.mxu0 %v322
    %533 = vmatprep.subr.mxu0 %v326
    %534 = vmatpush1.msra.mxu0 %v325
    %535 = vmatprep.subr.mxu0 %v329
    %536 = vmatpush1.msra.mxu0 %v328
    %537 = vmatprep.subr.mxu0 %v332
    %538 = vmatpush1.msra.mxu0 %v331
    %539 = vmatprep.subr.mxu0 %v335
    %540 = vmatpush1.msra.mxu0 %v334
    %541 = vmatprep.subr.mxu0 %v338
    %542 = vmatpush1.msra.mxu0 %v337
    %543 = vmatprep.subr.mxu0 %v341
    %544 = vmatpush1.msra.mxu0 %v340
    %545 = vmatprep.subr.mxu0 %v344
    %546 = vmatpush1.msra.mxu0 %v343
    %547 = vmatprep.subr.mxu0 %v347
    %548 = vmatpush1.msra.mxu0 %v346
    %549 = vmatprep.subr.mxu0 %v350
    %550 = vmatpush1.msra.mxu0 %v349
    %551 = vmatprep.subr.mxu0 %v353
    %552 = vmatpush1.msra.mxu0 %v352
    %553 = vmatprep.subr.mxu0 %v356
    %554 = vmatpush1.msra.mxu0 %v355
    %555 = vmatprep.subr.mxu0 %v359
    %556 = vmatpush1.msra.mxu0 %v358
    %557 = vmatprep.subr.mxu0 %v362
    %558 = vmatpush1.msra.mxu0 %v361
    %559 = vmatprep.subr.mxu0 %v365
    %560 = vmatpush1.msra.mxu0 %v364
    %561 = vmatprep.subr.mxu0 0.0
    %562 = vmatpush1.msra.mxu0 0.0
    %563 = vmatprep.subr.mxu0 0.0
    %564 = vmatpush1.msra.mxu0 0.0
    %565 = vmatprep.subr.mxu0 0.0
    %566 = vmatpush1.msra.mxu0 0.0
    %567 = vmatprep.subr.mxu0 0.0
    %568 = vmatpush1.msra.mxu0 0.0
    %569 = vmatprep.subr.mxu0 0.0
    %570 = vmatpush1.msra.mxu0 0.0
    %571 = vmatprep.subr.mxu0 0.0
    %572 = vmatpush1.msra.mxu0 0.0
    %573 = vmatprep.subr.mxu0 0.0
    %574 = vmatpush1.msra.mxu0 0.0
    %575 = vmatprep.subr.mxu0 0.0
    %576 = vmatpush1.msra.mxu0 0.0
    %577 = vmatprep.subr.mxu0 0.0
    %578 = vmatpush1.msra.mxu0 0.0
    %579 = vmatprep.subr.mxu0 0.0
    %580 = vmatpush1.msra.mxu0 0.0
    %581 = vmatprep.subr.mxu0 0.0
    %582 = vmatpush1.msra.mxu0 0.0
    %583 = vmatprep.subr.mxu0 0.0
    %584 = vmatpush1.msra.mxu0 0.0
    %585 = vmatprep.subr.mxu0 0.0
    %586 = vmatpush1.msra.mxu0 0.0
    %587 = vmatprep.subr.mxu0 0.0
    %588 = vmatpush1.msra.mxu0 0.0
    %589 = vmatprep.subr.mxu0 0.0
    %590 = vmatpush1.msra.mxu0 0.0
    %591 = vmatprep.subr.mxu0 0.0
    %592 = vmatpush1.msra.mxu0 0.0
    %593 = vmatprep.mubr.f32.mxu0 0.0
    %594 = vmatmul.mubr.f32.gmra.mrb[0].mxu0 %v528
    %v595 = vpop.f32.mrb[0].mxu0
    %v596 = vadd.f32 0.0, %v595
    %v597 = vpop.f32.mrb[0].mxu0
    %v598 = vadd.f32 0.0, %v597
    %599 = vdwg.mxu0
    %600 = vmatprep.subr.mxu0 0.0
    %601 = vmatpush1.msra.mxu0 %v321
    %602 = vmatprep.subr.mxu0 0.0
    %603 = vmatpush1.msra.mxu0 %v324
    %604 = vmatprep.subr.mxu0 0.0
    %605 = vmatpush1.msra.mxu0 %v327
    %606 = vmatprep.subr.mxu0 0.0
    %607 = vmatpush1.msra.mxu0 %v330
    %608 = vmatprep.subr.mxu0 0.0
    %609 = vmatpush1.msra.mxu0 %v333
    %610 = vmatprep.subr.mxu0 0.0
    %611 = vmatpush1.msra.mxu0 %v336
    %612 = vmatprep.subr.mxu0 0.0
    %613 = vmatpush1.msra.mxu0 %v339
    %614 = vmatprep.subr.mxu0 0.0
    %615 = vmatpush1.msra.mxu0 %v342
    %616 = vmatprep.subr.mxu0 0.0
    %617 = vmatpush1.msra.mxu0 %v345
    %618 = vmatprep.subr.mxu0 0.0
    %619 = vmatpush1.msra.mxu0 %v348
    %620 = vmatprep.subr.mxu0 0.0
    %621 = vmatpush1.msra.mxu0 %v351
    %622 = vmatprep.subr.mxu0 0.0
    %623 = vmatpush1.msra.mxu0 %v354
    %624 = vmatprep.subr.mxu0 0.0
    %625 = vmatpush1.msra.mxu0 %v357
    %626 = vmatprep.subr.mxu0 0.0
    %627 = vmatpush1.msra.mxu0 %v360
    %628 = vmatprep.subr.mxu0 0.0
    %629 = vmatpush1.msra.mxu0 %v363
    %630 = vmatprep.subr.mxu0 0.0
    %631 = vmatpush1.msra.mxu0 %v366
    %632 = vmatprep.subr.mxu0 0.0
    %633 = vmatpush1.msra.mxu0 0.0
    %634 = vmatprep.subr.mxu0 0.0
    %635 = vmatpush1.msra.mxu0 0.0
    %636 = vmatprep.subr.mxu0 0.0
    %637 = vmatpush1.msra.mxu0 0.0
    %638 = vmatprep.subr.mxu0 0.0
    %639 = vmatpush1.msra.mxu0 0.0
    %640 = vmatprep.subr.mxu0 0.0
    %641 = vmatpush1.msra.mxu0 0.0
    %642 = vmatprep.subr.mxu0 0.0
    %643 = vmatpush1.msra.mxu0 0.0
    %644 = vmatprep.subr.mxu0 0.0
    %645 = vmatpush1.msra.mxu0 0.0
    %646 = vmatprep.subr.mxu0 0.0
    %647 = vmatpush1.msra.mxu0 0.0
    %648 = vmatprep.subr.mxu0 0.0
    %649 = vmatpush1.msra.mxu0 0.0
    %650 = vmatprep.subr.mxu0 0.0
    %651 = vmatpush1.msra.mxu0 0.0
    %652 = vmatprep.subr.mxu0 0.0
    %653 = vmatpush1.msra.mxu0 0.0
    %654 = vmatprep.subr.mxu0 0.0
    %655 = vmatpush1.msra.mxu0 0.0
    %656 = vmatprep.subr.mxu0 0.0
    %657 = vmatpush1.msra.mxu0 0.0
    %658 = vmatprep.subr.mxu0 0.0
    %659 = vmatpush1.msra.mxu0 0.0
    %660 = vmatprep.subr.mxu0 0.0
    %661 = vmatpush1.msra.mxu0 0.0
    %662 = vmatprep.subr.mxu0 0.0
    %663 = vmatpush1.msra.mxu0 0.0
    %664 = vmatprep.mubr.f32.mxu0 0.0
    %665 = vmatmul.mubr.f32.gmra.mrb[0].mxu0 %v528
    %v666 = vpop.f32.mrb[0].mxu0
    %v667 = vadd.f32 0.0, %v666
    %v668 = vpop.f32.mrb[0].mxu0
    %669 = vdwg.mxu0
    %v670 = vadd.f32 %v174, %v596
    %v671 = vadd.f32 %v176, %v598
    %v672 = vxor.u32 %v670, 2147483648
    %v673 = vmul.f32 %v672, 1.442695
    %v674 = vpow.pop %v673
    %v675 = vadd.f32 %v674, 1.0
    %v676 = vrcp.pop %v675
    %v677 = vmul.f32 1.0, %v676
    %v678 = vxor.u32 %v671, 2147483648
    %v679 = vmul.f32 %v678, 1.442695
    %v680 = vpow.pop %v679
    %v681 = vadd.f32 %v680, 1.0
    %v682 = vrcp.pop %v681
    %v683 = vmul.f32 1.0, %v682
    %v684 = vmul.f32 %v677, %v667
    %v685 = vadd.f32 %v286, %v684
    %v686 = vtanh.pop %v685
    %v687 = vsub.f32 1.0, %v683
    %v688 = vmul.f32 %v687, %v686
    %v689 = vmul.f32 %v683, %v528
    %v690 = vadd.f32 %v688, %v689
    %691 = vmatprep.subr.mxu0 %v320
    %692 = vmatpush1.msra.mxu0 %v319
    %693 = vmatprep.subr.mxu0 %v323
    %694 = vmatpush1.msra.mxu0 %v322
    %695 = vmatprep.subr.mxu0 %v326
    %696 = vmatpush1.msra.mxu0 %v325
    %697 = vmatprep.subr.mxu0 %v329
    %698 = vmatpush1.msra.mxu0 %v328
    %699 = vmatprep.subr.mxu0 %v332
    %700 = vmatpush1.msra.mxu0 %v331
    %701 = vmatprep.subr.mxu0 %v335
    %702 = vmatpush1.msra.mxu0 %v334
    %703 = vmatprep.subr.mxu0 %v338
    %704 = vmatpush1.msra.mxu0 %v337
    %705 = vmatprep.subr.mxu0 %v341
    %706 = vmatpush1.msra.mxu0 %v340
    %707 = vmatprep.subr.mxu0 %v344
    %708 = vmatpush1.msra.mxu0 %v343
    %709 = vmatprep.subr.mxu0 %v347
    %710 = vmatpush1.msra.mxu0 %v346
    %711 = vmatprep.subr.mxu0 %v350
    %712 = vmatpush1.msra.mxu0 %v349
    %713 = vmatprep.subr.mxu0 %v353
    %714 = vmatpush1.msra.mxu0 %v352
    %715 = vmatprep.subr.mxu0 %v356
    %716 = vmatpush1.msra.mxu0 %v355
    %717 = vmatprep.subr.mxu0 %v359
    %718 = vmatpush1.msra.mxu0 %v358
    %719 = vmatprep.subr.mxu0 %v362
    %720 = vmatpush1.msra.mxu0 %v361
    %721 = vmatprep.subr.mxu0 %v365
    %722 = vmatpush1.msra.mxu0 %v364
    %723 = vmatprep.subr.mxu0 0.0
    %724 = vmatpush1.msra.mxu0 0.0
    %725 = vmatprep.subr.mxu0 0.0
    %726 = vmatpush1.msra.mxu0 0.0
    %727 = vmatprep.subr.mxu0 0.0
    %728 = vmatpush1.msra.mxu0 0.0
    %729 = vmatprep.subr.mxu0 0.0
    %730 = vmatpush1.msra.mxu0 0.0
    %731 = vmatprep.subr.mxu0 0.0
    %732 = vmatpush1.msra.mxu0 0.0
    %733 = vmatprep.subr.mxu0 0.0
    %734 = vmatpush1.msra.mxu0 0.0
    %735 = vmatprep.subr.mxu0 0.0
    %736 = vmatpush1.msra.mxu0 0.0
    %737 = vmatprep.subr.mxu0 0.0
    %738 = vmatpush1.msra.mxu0 0.0
    %739 = vmatprep.subr.mxu0 0.0
    %740 = vmatpush1.msra.mxu0 0.0
    %741 = vmatprep.subr.mxu0 0.0
    %742 = vmatpush1.msra.mxu0 0.0
    %743 = vmatprep.subr.mxu0 0.0
    %744 = vmatpush1.msra.mxu0 0.0
    %745 = vmatprep.subr.mxu0 0.0
    %746 = vmatpush1.msra.mxu0 0.0
    %747 = vmatprep.subr.mxu0 0.0
    %748 = vmatpush1.msra.mxu0 0.0
    %749 = vmatprep.subr.mxu0 0.0
    %750 = vmatpush1.msra.mxu0 0.0
    %751 = vmatprep.subr.mxu0 0.0
    %752 = vmatpush1.msra.mxu0 0.0
    %753 = vmatprep.subr.mxu0 0.0
    %754 = vmatpush1.msra.mxu0 0.0
    %755 = vmatprep.mubr.f32.mxu0 0.0
    %756 = vmatmul.mubr.f32.gmra.mrb[0].mxu0 %v690
    %v757 = vpop.f32.mrb[0].mxu0
    %v758 = vadd.f32 0.0, %v757
    %v759 = vpop.f32.mrb[0].mxu0
    %v760 = vadd.f32 0.0, %v759
    %761 = vdwg.mxu0
    %762 = vmatprep.subr.mxu0 0.0
    %763 = vmatpush1.msra.mxu0 %v321
    %764 = vmatprep.subr.mxu0 0.0
    %765 = vmatpush1.msra.mxu0 %v324
    %766 = vmatprep.subr.mxu0 0.0
    %767 = vmatpush1.msra.mxu0 %v327
    %768 = vmatprep.subr.mxu0 0.0
    %769 = vmatpush1.msra.mxu0 %v330
    %770 = vmatprep.subr.mxu0 0.0
    %771 = vmatpush1.msra.mxu0 %v333
    %772 = vmatprep.subr.mxu0 0.0
    %773 = vmatpush1.msra.mxu0 %v336
    %774 = vmatprep.subr.mxu0 0.0
    %775 = vmatpush1.msra.mxu0 %v339
    %776 = vmatprep.subr.mxu0 0.0
    %777 = vmatpush1.msra.mxu0 %v342
    %778 = vmatprep.subr.mxu0 0.0
    %779 = vmatpush1.msra.mxu0 %v345
    %780 = vmatprep.subr.mxu0 0.0
    %781 = vmatpush1.msra.mxu0 %v348
    %782 = vmatprep.subr.mxu0 0.0
    %783 = vmatpush1.msra.mxu0 %v351
    %784 = vmatprep.subr.mxu0 0.0
    %785 = vmatpush1.msra.mxu0 %v354
    %786 = vmatprep.subr.mxu0 0.0
    %787 = vmatpush1.msra.mxu0 %v357
    %788 = vmatprep.subr.mxu0 0.0
    %789 = vmatpush1.msra.mxu0 %v360
    %790 = vmatprep.subr.mxu0 0.0
    %791 = vmatpush1.msra.mxu0 %v363
    %792 = vmatprep.subr.mxu0 0.0
    %793 = vmatpush1.msra.mxu0 %v366
    %794 = vmatprep.subr.mxu0 0.0
    %795 = vmatpush1.msra.mxu0 0.0
    %796 = vmatprep.subr.mxu0 0.0
    %797 = vmatpush1.msra.mxu0 0.0
    %798 = vmatprep.subr.mxu0 0.0
    %799 = vmatpush1.msra.mxu0 0.0
    %800 = vmatprep.subr.mxu0 0.0
    %801 = vmatpush1.msra.mxu0 0.0
    %802 = vmatprep.subr.mxu0 0.0
    %803 = vmatpush1.msra.mxu0 0.0
    %804 = vmatprep.subr.mxu0 0.0
    %805 = vmatpush1.msra.mxu0 0.0
    %806 = vmatprep.subr.mxu0 0.0
    %807 = vmatpush1.msra.mxu0 0.0
    %808 = vmatprep.subr.mxu0 0.0
    %809 = vmatpush1.msra.mxu0 0.0
    %810 = vmatprep.subr.mxu0 0.0
    %811 = vmatpush1.msra.mxu0 0.0
    %812 = vmatprep.subr.mxu0 0.0
    %813 = vmatpush1.msra.mxu0 0.0
    %814 = vmatprep.subr.mxu0 0.0
    %815 = vmatpush1.msra.mxu0 0.0
    %816 = vmatprep.subr.mxu0 0.0
    %817 = vmatpush1.msra.mxu0 0.0
    %818 = vmatprep.subr.mxu0 0.0
    %819 = vmatpush1.msra.mxu0 0.0
    %820 = vmatprep.subr.mxu0 0.0
    %821 = vmatpush1.msra.mxu0 0.0
    %822 = vmatprep.subr.mxu0 0.0
    %823 = vmatpush1.msra.mxu0 0.0
    %824 = vmatprep.subr.mxu0 0.0
    %825 = vmatpush1.msra.mxu0 0.0
    %826 = vmatprep.mubr.f32.mxu0 0.0
    %827 = vmatmul.mubr.f32.gmra.mrb[0].mxu0 %v690
    %v828 = vpop.f32.mrb[0].mxu0
    %v829 = vadd.f32 0.0, %v828
    %v830 = vpop.f32.mrb[0].mxu0
    %831 = vdwg.mxu0
    %v832 = vadd.f32 %v180, %v758
    %v833 = vadd.f32 %v182, %v760
    %v834 = vxor.u32 %v832, 2147483648
    %v835 = vmul.f32 %v834, 1.442695
    %v836 = vpow.pop %v835
    %v837 = vadd.f32 %v836, 1.0
    %v838 = vrcp.pop %v837
    %v839 = vmul.f32 1.0, %v838
    %v840 = vxor.u32 %v833, 2147483648
    %v841 = vmul.f32 %v840, 1.442695
    %v842 = vpow.pop %v841
    %v843 = vadd.f32 %v842, 1.0
    %v844 = vrcp.pop %v843
    %v845 = vmul.f32 1.0, %v844
    %v846 = vmul.f32 %v839, %v829
    %v847 = vadd.f32 %v291, %v846
    %v848 = vtanh.pop %v847
    %v849 = vsub.f32 1.0, %v845
    %v850 = vmul.f32 %v849, %v848
    %v851 = vmul.f32 %v845, %v690
    %v852 = vadd.f32 %v850, %v851
    %853 = vmatprep.subr.mxu0 %v320
    %854 = vmatpush1.msra.mxu0 %v319
    %855 = vmatprep.subr.mxu0 %v323
    %856 = vmatpush1.msra.mxu0 %v322
    %857 = vmatprep.subr.mxu0 %v326
    %858 = vmatpush1.msra.mxu0 %v325
    %859 = vmatprep.subr.mxu0 %v329
    %860 = vmatpush1.msra.mxu0 %v328
    %861 = vmatprep.subr.mxu0 %v332
    %862 = vmatpush1.msra.mxu0 %v331
    %863 = vmatprep.subr.mxu0 %v335
    %864 = vmatpush1.msra.mxu0 %v334
    %865 = vmatprep.subr.mxu0 %v338
    %866 = vmatpush1.msra.mxu0 %v337
    %867 = vmatprep.subr.mxu0 %v341
    %868 = vmatpush1.msra.mxu0 %v340
    %869 = vmatprep.subr.mxu0 %v344
    %870 = vmatpush1.msra.mxu0 %v343
    %871 = vmatprep.subr.mxu0 %v347
    %872 = vmatpush1.msra.mxu0 %v346
    %873 = vmatprep.subr.mxu0 %v350
    %874 = vmatpush1.msra.mxu0 %v349
    %875 = vmatprep.subr.mxu0 %v353
    %876 = vmatpush1.msra.mxu0 %v352
    %877 = vmatprep.subr.mxu0 %v356
    %878 = vmatpush1.msra.mxu0 %v355
    %879 = vmatprep.subr.mxu0 %v359
    %880 = vmatpush1.msra.mxu0 %v358
    %881 = vmatprep.subr.mxu0 %v362
    %882 = vmatpush1.msra.mxu0 %v361
    %883 = vmatprep.subr.mxu0 %v365
    %884 = vmatpush1.msra.mxu0 %v364
    %885 = vmatprep.subr.mxu0 0.0
    %886 = vmatpush1.msra.mxu0 0.0
    %887 = vmatprep.subr.mxu0 0.0
    %888 = vmatpush1.msra.mxu0 0.0
    %889 = vmatprep.subr.mxu0 0.0
    %890 = vmatpush1.msra.mxu0 0.0
    %891 = vmatprep.subr.mxu0 0.0
    %892 = vmatpush1.msra.mxu0 0.0
    %893 = vmatprep.subr.mxu0 0.0
    %894 = vmatpush1.msra.mxu0 0.0
    %895 = vmatprep.subr.mxu0 0.0
    %896 = vmatpush1.msra.mxu0 0.0
    %897 = vmatprep.subr.mxu0 0.0
    %898 = vmatpush1.msra.mxu0 0.0
    %899 = vmatprep.subr.mxu0 0.0
    %900 = vmatpush1.msra.mxu0 0.0
    %901 = vmatprep.subr.mxu0 0.0
    %902 = vmatpush1.msra.mxu0 0.0
    %903 = vmatprep.subr.mxu0 0.0
    %904 = vmatpush1.msra.mxu0 0.0
    %905 = vmatprep.subr.mxu0 0.0
    %906 = vmatpush1.msra.mxu0 0.0
    %907 = vmatprep.subr.mxu0 0.0
    %908 = vmatpush1.msra.mxu0 0.0
    %909 = vmatprep.subr.mxu0 0.0
    %910 = vmatpush1.msra.mxu0 0.0
    %911 = vmatprep.subr.mxu0 0.0
    %912 = vmatpush1.msra.mxu0 0.0
    %913 = vmatprep.subr.mxu0 0.0
    %914 = vmatpush1.msra.mxu0 0.0
    %915 = vmatprep.subr.mxu0 0.0
    %916 = vmatpush1.msra.mxu0 0.0
    %917 = vmatprep.mubr.f32.mxu0 0.0
    %918 = vmatmul.mubr.f32.gmra.mrb[0].mxu0 %v852
    %v919 = vpop.f32.mrb[0].mxu0
    %v920 = vadd.f32 0.0, %v919
    %v921 = vpop.f32.mrb[0].mxu0
    %v922 = vadd.f32 0.0, %v921
    %923 = vdwg.mxu0
    %924 = vmatprep.subr.mxu0 0.0
    %925 = vmatpush1.msra.mxu0 %v321
    %926 = vmatprep.subr.mxu0 0.0
    %927 = vmatpush1.msra.mxu0 %v324
    %928 = vmatprep.subr.mxu0 0.0
    %929 = vmatpush1.msra.mxu0 %v327
    %930 = vmatprep.subr.mxu0 0.0
    %931 = vmatpush1.msra.mxu0 %v330
    %932 = vmatprep.subr.mxu0 0.0
    %933 = vmatpush1.msra.mxu0 %v333
    %934 = vmatprep.subr.mxu0 0.0
    %935 = vmatpush1.msra.mxu0 %v336
    %936 = vmatprep.subr.mxu0 0.0
    %937 = vmatpush1.msra.mxu0 %v339
    %938 = vmatprep.subr.mxu0 0.0
    %939 = vmatpush1.msra.mxu0 %v342
    %940 = vmatprep.subr.mxu0 0.0
    %941 = vmatpush1.msra.mxu0 %v345
    %942 = vmatprep.subr.mxu0 0.0
    %943 = vmatpush1.msra.mxu0 %v348
    %944 = vmatprep.subr.mxu0 0.0
    %945 = vmatpush1.msra.mxu0 %v351
    %946 = vmatprep.subr.mxu0 0.0
    %947 = vmatpush1.msra.mxu0 %v354
    %948 = vmatprep.subr.mxu0 0.0
    %949 = vmatpush1.msra.mxu0 %v357
    %950 = vmatprep.subr.mxu0 0.0
    %951 = vmatpush1.msra.mxu0 %v360
    %952 = vmatprep.subr.mxu0 0.0
    %953 = vmatpush1.msra.mxu0 %v363
    %954 = vmatprep.subr.mxu0 0.0
    %955 = vmatpush1.msra.mxu0 %v366
    %956 = vmatprep.subr.mxu0 0.0
    %957 = vmatpush1.msra.mxu0 0.0
    %958 = vmatprep.subr.mxu0 0.0
    %959 = vmatpush1.msra.mxu0 0.0
    %960 = vmatprep.subr.mxu0 0.0
    %961 = vmatpush1.msra.mxu0 0.0
    %962 = vmatprep.subr.mxu0 0.0
    %963 = vmatpush1.msra.mxu0 0.0
    %964 = vmatprep.subr.mxu0 0.0
    %965 = vmatpush1.msra.mxu0 0.0
    %966 = vmatprep.subr.mxu0 0.0
    %967 = vmatpush1.msra.mxu0 0.0
    %968 = vmatprep.subr.mxu0 0.0
    %969 = vmatpush1.msra.mxu0 0.0
    %970 = vmatprep.subr.mxu0 0.0
    %971 = vmatpush1.msra.mxu0 0.0
    %972 = vmatprep.subr.mxu0 0.0
    %973 = vmatpush1.msra.mxu0 0.0
    %974 = vmatprep.subr.mxu0 0.0
    %975 = vmatpush1.msra.mxu0 0.0
    %976 = vmatprep.subr.mxu0 0.0
    %977 = vmatpush1.msra.mxu0 0.0
    %978 = vmatprep.subr.mxu0 0.0
    %979 = vmatpush1.msra.mxu0 0.0
    %980 = vmatprep.subr.mxu0 0.0
    %981 = vmatpush1.msra.mxu0 0.0
    %982 = vmatprep.subr.mxu0 0.0
    %983 = vmatpush1.msra.mxu0 0.0
    %984 = vmatprep.subr.mxu0 0.0
    %985 = vmatpush1.msra.mxu0 0.0
    %986 = vmatprep.subr.mxu0 0.0
    %987 = vmatpush1.msra.mxu0 0.0
    %988 = vmatprep.mubr.f32.mxu0 0.0
    %989 = vmatmul.mubr.f32.gmra.mrb[0].mxu0 %v852
    %v990 = vpop.f32.mrb[0].mxu0
    %v991 = vadd.f32 0.0, %v990
    %v992 = vpop.f32.mrb[0].mxu0
    %993 = vdwg.mxu0
    %v994 = vadd.f32 %v186, %v920
    %v995 = vadd.f32 %v188, %v922
    %v996 = vxor.u32 %v994, 2147483648
    %v997 = vmul.f32 %v996, 1.442695
    %v998 = vpow.pop %v997
    %v999 = vadd.f32 %v998, 1.0
    %v1000 = vrcp.pop %v999
    %v1001 = vmul.f32 1.0, %v1000
    %v1002 = vxor.u32 %v995, 2147483648
    %v1003 = vmul.f32 %v1002, 1.442695
    %v1004 = vpow.pop %v1003
    %v1005 = vadd.f32 %v1004, 1.0
    %v1006 = vrcp.pop %v1005
    %v1007 = vmul.f32 1.0, %v1006
    %v1008 = vmul.f32 %v1001, %v991
    %v1009 = vadd.f32 %v296, %v1008
    %v1010 = vtanh.pop %v1009
    %v1011 = vsub.f32 1.0, %v1007
    %v1012 = vmul.f32 %v1011, %v1010
    %v1013 = vmul.f32 %v1007, %v852
    %v1014 = vadd.f32 %v1012, %v1013
    %1015 = vmatprep.subr.mxu0 %v320
    %1016 = vmatpush1.msra.mxu0 %v319
    %1017 = vmatprep.subr.mxu0 %v323
    %1018 = vmatpush1.msra.mxu0 %v322
    %1019 = vmatprep.subr.mxu0 %v326
    %1020 = vmatpush1.msra.mxu0 %v325
    %1021 = vmatprep.subr.mxu0 %v329
    %1022 = vmatpush1.msra.mxu0 %v328
    %1023 = vmatprep.subr.mxu0 %v332
    %1024 = vmatpush1.msra.mxu0 %v331
    %1025 = vmatprep.subr.mxu0 %v335
    %1026 = vmatpush1.msra.mxu0 %v334
    %1027 = vmatprep.subr.mxu0 %v338
    %1028 = vmatpush1.msra.mxu0 %v337
    %1029 = vmatprep.subr.mxu0 %v341
    %1030 = vmatpush1.msra.mxu0 %v340
    %1031 = vmatprep.subr.mxu0 %v344
    %1032 = vmatpush1.msra.mxu0 %v343
    %1033 = vmatprep.subr.mxu0 %v347
    %1034 = vmatpush1.msra.mxu0 %v346
    %1035 = vmatprep.subr.mxu0 %v350
    %1036 = vmatpush1.msra.mxu0 %v349
    %1037 = vmatprep.subr.mxu0 %v353
    %1038 = vmatpush1.msra.mxu0 %v352
    %1039 = vmatprep.subr.mxu0 %v356
    %1040 = vmatpush1.msra.mxu0 %v355
    %1041 = vmatprep.subr.mxu0 %v359
    %1042 = vmatpush1.msra.mxu0 %v358
    %1043 = vmatprep.subr.mxu0 %v362
    %1044 = vmatpush1.msra.mxu0 %v361
    %1045 = vmatprep.subr.mxu0 %v365
    %1046 = vmatpush1.msra.mxu0 %v364
    %1047 = vmatprep.subr.mxu0 0.0
    %1048 = vmatpush1.msra.mxu0 0.0
    %1049 = vmatprep.subr.mxu0 0.0
    %1050 = vmatpush1.msra.mxu0 0.0
    %1051 = vmatprep.subr.mxu0 0.0
    %1052 = vmatpush1.msra.mxu0 0.0
    %1053 = vmatprep.subr.mxu0 0.0
    %1054 = vmatpush1.msra.mxu0 0.0
    %1055 = vmatprep.subr.mxu0 0.0
    %1056 = vmatpush1.msra.mxu0 0.0
    %1057 = vmatprep.subr.mxu0 0.0
    %1058 = vmatpush1.msra.mxu0 0.0
    %1059 = vmatprep.subr.mxu0 0.0
    %1060 = vmatpush1.msra.mxu0 0.0
    %1061 = vmatprep.subr.mxu0 0.0
    %1062 = vmatpush1.msra.mxu0 0.0
    %1063 = vmatprep.subr.mxu0 0.0
    %1064 = vmatpush1.msra.mxu0 0.0
    %1065 = vmatprep.subr.mxu0 0.0
    %1066 = vmatpush1.msra.mxu0 0.0
    %1067 = vmatprep.subr.mxu0 0.0
    %1068 = vmatpush1.msra.mxu0 0.0
    %1069 = vmatprep.subr.mxu0 0.0
    %1070 = vmatpush1.msra.mxu0 0.0
    %1071 = vmatprep.subr.mxu0 0.0
    %1072 = vmatpush1.msra.mxu0 0.0
    %1073 = vmatprep.subr.mxu0 0.0
    %1074 = vmatpush1.msra.mxu0 0.0
    %1075 = vmatprep.subr.mxu0 0.0
    %1076 = vmatpush1.msra.mxu0 0.0
    %1077 = vmatprep.subr.mxu0 0.0
    %1078 = vmatpush1.msra.mxu0 0.0
    %1079 = vmatprep.mubr.f32.mxu0 0.0
    %1080 = vmatmul.mubr.f32.gmra.mrb[0].mxu0 %v1014
    %v1081 = vpop.f32.mrb[0].mxu0
    %v1082 = vadd.f32 0.0, %v1081
    %v1083 = vpop.f32.mrb[0].mxu0
    %v1084 = vadd.f32 0.0, %v1083
    %1085 = vdwg.mxu0
    %1086 = vmatprep.subr.mxu0 0.0
    %1087 = vmatpush1.msra.mxu0 %v321
    %1088 = vmatprep.subr.mxu0 0.0
    %1089 = vmatpush1.msra.mxu0 %v324
    %1090 = vmatprep.subr.mxu0 0.0
    %1091 = vmatpush1.msra.mxu0 %v327
    %1092 = vmatprep.subr.mxu0 0.0
    %1093 = vmatpush1.msra.mxu0 %v330
    %1094 = vmatprep.subr.mxu0 0.0
    %1095 = vmatpush1.msra.mxu0 %v333
    %1096 = vmatprep.subr.mxu0 0.0
    %1097 = vmatpush1.msra.mxu0 %v336
    %1098 = vmatprep.subr.mxu0 0.0
    %1099 = vmatpush1.msra.mxu0 %v339
    %1100 = vmatprep.subr.mxu0 0.0
    %1101 = vmatpush1.msra.mxu0 %v342
    %1102 = vmatprep.subr.mxu0 0.0
    %1103 = vmatpush1.msra.mxu0 %v345
    %1104 = vmatprep.subr.mxu0 0.0
    %1105 = vmatpush1.msra.mxu0 %v348
    %1106 = vmatprep.subr.mxu0 0.0
    %1107 = vmatpush1.msra.mxu0 %v351
    %1108 = vmatprep.subr.mxu0 0.0
    %1109 = vmatpush1.msra.mxu0 %v354
    %1110 = vmatprep.subr.mxu0 0.0
    %1111 = vmatpush1.msra.mxu0 %v357
    %1112 = vmatprep.subr.mxu0 0.0
    %1113 = vmatpush1.msra.mxu0 %v360
    %1114 = vmatprep.subr.mxu0 0.0
    %1115 = vmatpush1.msra.mxu0 %v363
    %1116 = vmatprep.subr.mxu0 0.0
    %1117 = vmatpush1.msra.mxu0 %v366
    %1118 = vmatprep.subr.mxu0 0.0
    %1119 = vmatpush1.msra.mxu0 0.0
    %1120 = vmatprep.subr.mxu0 0.0
    %1121 = vmatpush1.msra.mxu0 0.0
    %1122 = vmatprep.subr.mxu0 0.0
    %1123 = vmatpush1.msra.mxu0 0.0
    %1124 = vmatprep.subr.mxu0 0.0
    %1125 = vmatpush1.msra.mxu0 0.0
    %1126 = vmatprep.subr.mxu0 0.0
    %1127 = vmatpush1.msra.mxu0 0.0
    %1128 = vmatprep.subr.mxu0 0.0
    %1129 = vmatpush1.msra.mxu0 0.0
    %1130 = vmatprep.subr.mxu0 0.0
    %1131 = vmatpush1.msra.mxu0 0.0
    %1132 = vmatprep.subr.mxu0 0.0
    %1133 = vmatpush1.msra.mxu0 0.0
    %1134 = vmatprep.subr.mxu0 0.0
    %1135 = vmatpush1.msra.mxu0 0.0
    %1136 = vmatprep.subr.mxu0 0.0
    %1137 = vmatpush1.msra.mxu0 0.0
    %1138 = vmatprep.subr.mxu0 0.0
    %1139 = vmatpush1.msra.mxu0 0.0
    %1140 = vmatprep.subr.mxu0 0.0
    %1141 = vmatpush1.msra.mxu0 0.0
    %1142 = vmatprep.subr.mxu0 0.0
    %1143 = vmatpush1.msra.mxu0 0.0
    %1144 = vmatprep.subr.mxu0 0.0
    %1145 = vmatpush1.msra.mxu0 0.0
    %1146 = vmatprep.subr.mxu0 0.0
    %1147 = vmatpush1.msra.mxu0 0.0
    %1148 = vmatprep.subr.mxu0 0.0
    %1149 = vmatpush1.msra.mxu0 0.0
    %1150 = vmatprep.mubr.f32.mxu0 0.0
    %1151 = vmatmul.mubr.f32.gmra.mrb[0].mxu0 %v1014
    %v1152 = vpop.f32.mrb[0].mxu0
    %v1153 = vadd.f32 0.0, %v1152
    %v1154 = vpop.f32.mrb[0].mxu0
    %1155 = vdwg.mxu0
    %v1156 = vadd.f32 %v192, %v1082
    %v1157 = vadd.f32 %v194, %v1084
    %v1158 = vxor.u32 %v1156, 2147483648
    %v1159 = vmul.f32 %v1158, 1.442695
    %v1160 = vpow.pop %v1159
    %v1161 = vadd.f32 %v1160, 1.0
    %v1162 = vrcp.pop %v1161
    %v1163 = vmul.f32 1.0, %v1162
    %v1164 = vxor.u32 %v1157, 2147483648
    %v1165 = vmul.f32 %v1164, 1.442695
    %v1166 = vpow.pop %v1165
    %v1167 = vadd.f32 %v1166, 1.0
    %v1168 = vrcp.pop %v1167
    %v1169 = vmul.f32 1.0, %v1168
    %v1170 = vmul.f32 %v1163, %v1153
    %v1171 = vadd.f32 %v301, %v1170
    %v1172 = vtanh.pop %v1171
    %v1173 = vsub.f32 1.0, %v1169
    %v1174 = vmul.f32 %v1173, %v1172
    %v1175 = vmul.f32 %v1169, %v1014
    %v1176 = vadd.f32 %v1174, %v1175
    %1177 = vmatprep.subr.mxu0 %v320
    %1178 = vmatpush1.msra.mxu0 %v319
    %1179 = vmatprep.subr.mxu0 %v323
    %1180 = vmatpush1.msra.mxu0 %v322
    %1181 = vmatprep.subr.mxu0 %v326
    %1182 = vmatpush1.msra.mxu0 %v325
    %1183 = vmatprep.subr.mxu0 %v329
    %1184 = vmatpush1.msra.mxu0 %v328
    %1185 = vmatprep.subr.mxu0 %v332
    %1186 = vmatpush1.msra.mxu0 %v331
    %1187 = vmatprep.subr.mxu0 %v335
    %1188 = vmatpush1.msra.mxu0 %v334
    %1189 = vmatprep.subr.mxu0 %v338
    %1190 = vmatpush1.msra.mxu0 %v337
    %1191 = vmatprep.subr.mxu0 %v341
    %1192 = vmatpush1.msra.mxu0 %v340
    %1193 = vmatprep.subr.mxu0 %v344
    %1194 = vmatpush1.msra.mxu0 %v343
    %1195 = vmatprep.subr.mxu0 %v347
    %1196 = vmatpush1.msra.mxu0 %v346
    %1197 = vmatprep.subr.mxu0 %v350
    %1198 = vmatpush1.msra.mxu0 %v349
    %1199 = vmatprep.subr.mxu0 %v353
    %1200 = vmatpush1.msra.mxu0 %v352
    %1201 = vmatprep.subr.mxu0 %v356
    %1202 = vmatpush1.msra.mxu0 %v355
    %1203 = vmatprep.subr.mxu0 %v359
    %1204 = vmatpush1.msra.mxu0 %v358
    %1205 = vmatprep.subr.mxu0 %v362
    %1206 = vmatpush1.msra.mxu0 %v361
    %1207 = vmatprep.subr.mxu0 %v365
    %1208 = vmatpush1.msra.mxu0 %v364
    %1209 = vmatprep.subr.mxu0 0.0
    %1210 = vmatpush1.msra.mxu0 0.0
    %1211 = vmatprep.subr.mxu0 0.0
    %1212 = vmatpush1.msra.mxu0 0.0
    %1213 = vmatprep.subr.mxu0 0.0
    %1214 = vmatpush1.msra.mxu0 0.0
    %1215 = vmatprep.subr.mxu0 0.0
    %1216 = vmatpush1.msra.mxu0 0.0
    %1217 = vmatprep.subr.mxu0 0.0
    %1218 = vmatpush1.msra.mxu0 0.0
    %1219 = vmatprep.subr.mxu0 0.0
    %1220 = vmatpush1.msra.mxu0 0.0
    %1221 = vmatprep.subr.mxu0 0.0
    %1222 = vmatpush1.msra.mxu0 0.0
    %1223 = vmatprep.subr.mxu0 0.0
    %1224 = vmatpush1.msra.mxu0 0.0
    %1225 = vmatprep.subr.mxu0 0.0
    %1226 = vmatpush1.msra.mxu0 0.0
    %1227 = vmatprep.subr.mxu0 0.0
    %1228 = vmatpush1.msra.mxu0 0.0
    %1229 = vmatprep.subr.mxu0 0.0
    %1230 = vmatpush1.msra.mxu0 0.0
    %1231 = vmatprep.subr.mxu0 0.0
    %1232 = vmatpush1.msra.mxu0 0.0
    %1233 = vmatprep.subr.mxu0 0.0
    %1234 = vmatpush1.msra.mxu0 0.0
    %1235 = vmatprep.subr.mxu0 0.0
    %1236 = vmatpush1.msra.mxu0 0.0
    %1237 = vmatprep.subr.mxu0 0.0
    %1238 = vmatpush1.msra.mxu0 0.0
    %1239 = vmatprep.subr.mxu0 0.0
    %1240 = vmatpush1.msra.mxu0 0.0
    %1241 = vmatprep.mubr.f32.mxu0 0.0
    %1242 = vmatmul.mubr.f32.gmra.mrb[0].mxu0 %v1176
    %v1243 = vpop.f32.mrb[0].mxu0
    %v1244 = vadd.f32 0.0, %v1243
    %v1245 = vpop.f32.mrb[0].mxu0
    %v1246 = vadd.f32 0.0, %v1245
    %1247 = vdwg.mxu0
    %1248 = vmatprep.subr.mxu0 0.0
    %1249 = vmatpush1.msra.mxu0 %v321
    %1250 = vmatprep.subr.mxu0 0.0
    %1251 = vmatpush1.msra.mxu0 %v324
    %1252 = vmatprep.subr.mxu0 0.0
    %1253 = vmatpush1.msra.mxu0 %v327
    %1254 = vmatprep.subr.mxu0 0.0
    %1255 = vmatpush1.msra.mxu0 %v330
    %1256 = vmatprep.subr.mxu0 0.0
    %1257 = vmatpush1.msra.mxu0 %v333
    %1258 = vmatprep.subr.mxu0 0.0
    %1259 = vmatpush1.msra.mxu0 %v336
    %1260 = vmatprep.subr.mxu0 0.0
    %1261 = vmatpush1.msra.mxu0 %v339
    %1262 = vmatprep.subr.mxu0 0.0
    %1263 = vmatpush1.msra.mxu0 %v342
    %1264 = vmatprep.subr.mxu0 0.0
    %1265 = vmatpush1.msra.mxu0 %v345
    %1266 = vmatprep.subr.mxu0 0.0
    %1267 = vmatpush1.msra.mxu0 %v348
    %1268 = vmatprep.subr.mxu0 0.0
    %1269 = vmatpush1.msra.mxu0 %v351
    %1270 = vmatprep.subr.mxu0 0.0
    %1271 = vmatpush1.msra.mxu0 %v354
    %1272 = vmatprep.subr.mxu0 0.0
    %1273 = vmatpush1.msra.mxu0 %v357
    %1274 = vmatprep.subr.mxu0 0.0
    %1275 = vmatpush1.msra.mxu0 %v360
    %1276 = vmatprep.subr.mxu0 0.0
    %1277 = vmatpush1.msra.mxu0 %v363
    %1278 = vmatprep.subr.mxu0 0.0
    %1279 = vmatpush1.msra.mxu0 %v366
    %1280 = vmatprep.subr.mxu0 0.0
    %1281 = vmatpush1.msra.mxu0 0.0
    %1282 = vmatprep.subr.mxu0 0.0
    %1283 = vmatpush1.msra.mxu0 0.0
    %1284 = vmatprep.subr.mxu0 0.0
    %1285 = vmatpush1.msra.mxu0 0.0
    %1286 = vmatprep.subr.mxu0 0.0
    %1287 = vmatpush1.msra.mxu0 0.0
    %1288 = vmatprep.subr.mxu0 0.0
    %1289 = vmatpush1.msra.mxu0 0.0
    %1290 = vmatprep.subr.mxu0 0.0
    %1291 = vmatpush1.msra.mxu0 0.0
    %1292 = vmatprep.subr.mxu0 0.0
    %1293 = vmatpush1.msra.mxu0 0.0
    %1294 = vmatprep.subr.mxu0 0.0
    %1295 = vmatpush1.msra.mxu0 0.0
    %1296 = vmatprep.subr.mxu0 0.0
    %1297 = vmatpush1.msra.mxu0 0.0
    %1298 = vmatprep.subr.mxu0 0.0
    %1299 = vmatpush1.msra.mxu0 0.0
    %1300 = vmatprep.subr.mxu0 0.0
    %1301 = vmatpush1.msra.mxu0 0.0
    %1302 = vmatprep.subr.mxu0 0.0
    %1303 = vmatpush1.msra.mxu0 0.0
    %1304 = vmatprep.subr.mxu0 0.0
    %1305 = vmatpush1.msra.mxu0 0.0
    %1306 = vmatprep.subr.mxu0 0.0
    %1307 = vmatpush1.msra.mxu0 0.0
    %1308 = vmatprep.subr.mxu0 0.0
    %1309 = vmatpush1.msra.mxu0 0.0
    %1310 = vmatprep.subr.mxu0 0.0
    %1311 = vmatpush1.msra.mxu0 0.0
    %1312 = vmatprep.mubr.f32.mxu0 0.0
    %1313 = vmatmul.mubr.f32.gmra.mrb[0].mxu0 %v1176
    %v1314 = vpop.f32.mrb[0].mxu0
    %v1315 = vadd.f32 0.0, %v1314
    %v1316 = vpop.f32.mrb[0].mxu0
    %1317 = vdwg.mxu0
    %v1318 = vadd.f32 %v198, %v1244
    %v1319 = vadd.f32 %v200, %v1246
    %v1320 = vxor.u32 %v1318, 2147483648
    %v1321 = vmul.f32 %v1320, 1.442695
    %v1322 = vpow.pop %v1321
    %v1323 = vadd.f32 %v1322, 1.0
    %v1324 = vrcp.pop %v1323
    %v1325 = vmul.f32 1.0, %v1324
    %v1326 = vxor.u32 %v1319, 2147483648
    %v1327 = vmul.f32 %v1326, 1.442695
    %v1328 = vpow.pop %v1327
    %v1329 = vadd.f32 %v1328, 1.0
    %v1330 = vrcp.pop %v1329
    %v1331 = vmul.f32 1.0, %v1330
    %v1332 = vmul.f32 %v1325, %v1315
    %v1333 = vadd.f32 %v306, %v1332
    %v1334 = vtanh.pop %v1333
    %v1335 = vsub.f32 1.0, %v1331
    %v1336 = vmul.f32 %v1335, %v1334
    %v1337 = vmul.f32 %v1331, %v1176
    %v1338 = vadd.f32 %v1336, %v1337
    %1339 = vmatprep.subr.mxu0 %v320
    %1340 = vmatpush1.msra.mxu0 %v319
    %1341 = vmatprep.subr.mxu0 %v323
    %1342 = vmatpush1.msra.mxu0 %v322
    %1343 = vmatprep.subr.mxu0 %v326
    %1344 = vmatpush1.msra.mxu0 %v325
    %1345 = vmatprep.subr.mxu0 %v329
    %1346 = vmatpush1.msra.mxu0 %v328
    %1347 = vmatprep.subr.mxu0 %v332
    %1348 = vmatpush1.msra.mxu0 %v331
    %1349 = vmatprep.subr.mxu0 %v335
    %1350 = vmatpush1.msra.mxu0 %v334
    %1351 = vmatprep.subr.mxu0 %v338
    %1352 = vmatpush1.msra.mxu0 %v337
    %1353 = vmatprep.subr.mxu0 %v341
    %1354 = vmatpush1.msra.mxu0 %v340
    %1355 = vmatprep.subr.mxu0 %v344
    %1356 = vmatpush1.msra.mxu0 %v343
    %1357 = vmatprep.subr.mxu0 %v347
    %1358 = vmatpush1.msra.mxu0 %v346
    %1359 = vmatprep.subr.mxu0 %v350
    %1360 = vmatpush1.msra.mxu0 %v349
    %1361 = vmatprep.subr.mxu0 %v353
    %1362 = vmatpush1.msra.mxu0 %v352
    %1363 = vmatprep.subr.mxu0 %v356
    %1364 = vmatpush1.msra.mxu0 %v355
    %1365 = vmatprep.subr.mxu0 %v359
    %1366 = vmatpush1.msra.mxu0 %v358
    %1367 = vmatprep.subr.mxu0 %v362
    %1368 = vmatpush1.msra.mxu0 %v361
    %1369 = vmatprep.subr.mxu0 %v365
    %1370 = vmatpush1.msra.mxu0 %v364
    %1371 = vmatprep.subr.mxu0 0.0
    %1372 = vmatpush1.msra.mxu0 0.0
    %1373 = vmatprep.subr.mxu0 0.0
    %1374 = vmatpush1.msra.mxu0 0.0
    %1375 = vmatprep.subr.mxu0 0.0
    %1376 = vmatpush1.msra.mxu0 0.0
    %1377 = vmatprep.subr.mxu0 0.0
    %1378 = vmatpush1.msra.mxu0 0.0
    %1379 = vmatprep.subr.mxu0 0.0
    %1380 = vmatpush1.msra.mxu0 0.0
    %1381 = vmatprep.subr.mxu0 0.0
    %1382 = vmatpush1.msra.mxu0 0.0
    %1383 = vmatprep.subr.mxu0 0.0
    %1384 = vmatpush1.msra.mxu0 0.0
    %1385 = vmatprep.subr.mxu0 0.0
    %1386 = vmatpush1.msra.mxu0 0.0
    %1387 = vmatprep.subr.mxu0 0.0
    %1388 = vmatpush1.msra.mxu0 0.0
    %1389 = vmatprep.subr.mxu0 0.0
    %1390 = vmatpush1.msra.mxu0 0.0
    %1391 = vmatprep.subr.mxu0 0.0
    %1392 = vmatpush1.msra.mxu0 0.0
    %1393 = vmatprep.subr.mxu0 0.0
    %1394 = vmatpush1.msra.mxu0 0.0
    %1395 = vmatprep.subr.mxu0 0.0
    %1396 = vmatpush1.msra.mxu0 0.0
    %1397 = vmatprep.subr.mxu0 0.0
    %1398 = vmatpush1.msra.mxu0 0.0
    %1399 = vmatprep.subr.mxu0 0.0
    %1400 = vmatpush1.msra.mxu0 0.0
    %1401 = vmatprep.subr.mxu0 0.0
    %1402 = vmatpush1.msra.mxu0 0.0
    %1403 = vmatprep.mubr.f32.mxu0 0.0
    %1404 = vmatmul.mubr.f32.gmra.mrb[0].mxu0 %v1338
    %v1405 = vpop.f32.mrb[0].mxu0
    %v1406 = vadd.f32 0.0, %v1405
    %v1407 = vpop.f32.mrb[0].mxu0
    %v1408 = vadd.f32 0.0, %v1407
    %1409 = vdwg.mxu0
    %1410 = vmatprep.subr.mxu0 0.0
    %1411 = vmatpush1.msra.mxu0 %v321
    %1412 = vmatprep.subr.mxu0 0.0
    %1413 = vmatpush1.msra.mxu0 %v324
    %1414 = vmatprep.subr.mxu0 0.0
    %1415 = vmatpush1.msra.mxu0 %v327
    %1416 = vmatprep.subr.mxu0 0.0
    %1417 = vmatpush1.msra.mxu0 %v330
    %1418 = vmatprep.subr.mxu0 0.0
    %1419 = vmatpush1.msra.mxu0 %v333
    %1420 = vmatprep.subr.mxu0 0.0
    %1421 = vmatpush1.msra.mxu0 %v336
    %1422 = vmatprep.subr.mxu0 0.0
    %1423 = vmatpush1.msra.mxu0 %v339
    %1424 = vmatprep.subr.mxu0 0.0
    %1425 = vmatpush1.msra.mxu0 %v342
    %1426 = vmatprep.subr.mxu0 0.0
    %1427 = vmatpush1.msra.mxu0 %v345
    %1428 = vmatprep.subr.mxu0 0.0
    %1429 = vmatpush1.msra.mxu0 %v348
    %1430 = vmatprep.subr.mxu0 0.0
    %1431 = vmatpush1.msra.mxu0 %v351
    %1432 = vmatprep.subr.mxu0 0.0
    %1433 = vmatpush1.msra.mxu0 %v354
    %1434 = vmatprep.subr.mxu0 0.0
    %1435 = vmatpush1.msra.mxu0 %v357
    %1436 = vmatprep.subr.mxu0 0.0
    %1437 = vmatpush1.msra.mxu0 %v360
    %1438 = vmatprep.subr.mxu0 0.0
    %1439 = vmatpush1.msra.mxu0 %v363
    %1440 = vmatprep.subr.mxu0 0.0
    %1441 = vmatpush1.msra.mxu0 %v366
    %1442 = vmatprep.subr.mxu0 0.0
    %1443 = vmatpush1.msra.mxu0 0.0
    %1444 = vmatprep.subr.mxu0 0.0
    %1445 = vmatpush1.msra.mxu0 0.0
    %1446 = vmatprep.subr.mxu0 0.0
    %1447 = vmatpush1.msra.mxu0 0.0
    %1448 = vmatprep.subr.mxu0 0.0
    %1449 = vmatpush1.msra.mxu0 0.0
    %1450 = vmatprep.subr.mxu0 0.0
    %1451 = vmatpush1.msra.mxu0 0.0
    %1452 = vmatprep.subr.mxu0 0.0
    %1453 = vmatpush1.msra.mxu0 0.0
    %1454 = vmatprep.subr.mxu0 0.0
    %1455 = vmatpush1.msra.mxu0 0.0
    %1456 = vmatprep.subr.mxu0 0.0
    %1457 = vmatpush1.msra.mxu0 0.0
    %1458 = vmatprep.subr.mxu0 0.0
    %1459 = vmatpush1.msra.mxu0 0.0
    %1460 = vmatprep.subr.mxu0 0.0
    %1461 = vmatpush1.msra.mxu0 0.0
    %1462 = vmatprep.subr.mxu0 0.0
    %1463 = vmatpush1.msra.mxu0 0.0
    %1464 = vmatprep.subr.mxu0 0.0
    %1465 = vmatpush1.msra.mxu0 0.0
    %1466 = vmatprep.subr.mxu0 0.0
    %1467 = vmatpush1.msra.mxu0 0.0
    %1468 = vmatprep.subr.mxu0 0.0
    %1469 = vmatpush1.msra.mxu0 0.0
    %1470 = vmatprep.subr.mxu0 0.0
    %1471 = vmatpush1.msra.mxu0 0.0
    %1472 = vmatprep.subr.mxu0 0.0
    %1473 = vmatpush1.msra.mxu0 0.0
    %1474 = vmatprep.mubr.f32.mxu0 0.0
    %1475 = vmatmul.mubr.f32.gmra.mrb[0].mxu0 %v1338
    %v1476 = vpop.f32.mrb[0].mxu0
    %v1477 = vadd.f32 0.0, %v1476
    %v1478 = vpop.f32.mrb[0].mxu0
    %1479 = vdwg.mxu0
    %v1480 = vadd.f32 %v204, %v1406
    %v1481 = vadd.f32 %v206, %v1408
    %v1482 = vxor.u32 %v1480, 2147483648
    %v1483 = vmul.f32 %v1482, 1.442695
    %v1484 = vpow.pop %v1483
    %v1485 = vadd.f32 %v1484, 1.0
    %v1486 = vrcp.pop %v1485
    %v1487 = vmul.f32 1.0, %v1486
    %v1488 = vxor.u32 %v1481, 2147483648
    %v1489 = vmul.f32 %v1488, 1.442695
    %v1490 = vpow.pop %v1489
    %v1491 = vadd.f32 %v1490, 1.0
    %v1492 = vrcp.pop %v1491
    %v1493 = vmul.f32 1.0, %v1492
    %v1494 = vmul.f32 %v1487, %v1477
    %v1495 = vadd.f32 %v311, %v1494
    %v1496 = vtanh.pop %v1495
    %v1497 = vsub.f32 1.0, %v1493
    %v1498 = vmul.f32 %v1497, %v1496
    %v1499 = vmul.f32 %v1493, %v1338
    %v1500 = vadd.f32 %v1498, %v1499
    %1501 = vmatprep.subr.mxu0 %v320
    %1502 = vmatpush1.msra.mxu0 %v319
    %1503 = vmatprep.subr.mxu0 %v323
    %1504 = vmatpush1.msra.mxu0 %v322
    %1505 = vmatprep.subr.mxu0 %v326
    %1506 = vmatpush1.msra.mxu0 %v325
    %1507 = vmatprep.subr.mxu0 %v329
    %1508 = vmatpush1.msra.mxu0 %v328
    %1509 = vmatprep.subr.mxu0 %v332
    %1510 = vmatpush1.msra.mxu0 %v331
    %1511 = vmatprep.subr.mxu0 %v335
    %1512 = vmatpush1.msra.mxu0 %v334
    %1513 = vmatprep.subr.mxu0 %v338
    %1514 = vmatpush1.msra.mxu0 %v337
    %1515 = vmatprep.subr.mxu0 %v341
    %1516 = vmatpush1.msra.mxu0 %v340
    %1517 = vmatprep.subr.mxu0 %v344
    %1518 = vmatpush1.msra.mxu0 %v343
    %1519 = vmatprep.subr.mxu0 %v347
    %1520 = vmatpush1.msra.mxu0 %v346
    %1521 = vmatprep.subr.mxu0 %v350
    %1522 = vmatpush1.msra.mxu0 %v349
    %1523 = vmatprep.subr.mxu0 %v353
    %1524 = vmatpush1.msra.mxu0 %v352
    %1525 = vmatprep.subr.mxu0 %v356
    %1526 = vmatpush1.msra.mxu0 %v355
    %1527 = vmatprep.subr.mxu0 %v359
    %1528 = vmatpush1.msra.mxu0 %v358
    %1529 = vmatprep.subr.mxu0 %v362
    %1530 = vmatpush1.msra.mxu0 %v361
    %1531 = vmatprep.subr.mxu0 %v365
    %1532 = vmatpush1.msra.mxu0 %v364
    %1533 = vmatprep.subr.mxu0 0.0
    %1534 = vmatpush1.msra.mxu0 0.0
    %1535 = vmatprep.subr.mxu0 0.0
    %1536 = vmatpush1.msra.mxu0 0.0
    %1537 = vmatprep.subr.mxu0 0.0
    %1538 = vmatpush1.msra.mxu0 0.0
    %1539 = vmatprep.subr.mxu0 0.0
    %1540 = vmatpush1.msra.mxu0 0.0
    %1541 = vmatprep.subr.mxu0 0.0
    %1542 = vmatpush1.msra.mxu0 0.0
    %1543 = vmatprep.subr.mxu0 0.0
    %1544 = vmatpush1.msra.mxu0 0.0
    %1545 = vmatprep.subr.mxu0 0.0
    %1546 = vmatpush1.msra.mxu0 0.0
    %1547 = vmatprep.subr.mxu0 0.0
    %1548 = vmatpush1.msra.mxu0 0.0
    %1549 = vmatprep.subr.mxu0 0.0
    %1550 = vmatpush1.msra.mxu0 0.0
    %1551 = vmatprep.subr.mxu0 0.0
    %1552 = vmatpush1.msra.mxu0 0.0
    %1553 = vmatprep.subr.mxu0 0.0
    %1554 = vmatpush1.msra.mxu0 0.0
    %1555 = vmatprep.subr.mxu0 0.0
    %1556 = vmatpush1.msra.mxu0 0.0
    %1557 = vmatprep.subr.mxu0 0.0
    %1558 = vmatpush1.msra.mxu0 0.0
    %1559 = vmatprep.subr.mxu0 0.0
    %1560 = vmatpush1.msra.mxu0 0.0
    %1561 = vmatprep.subr.mxu0 0.0
    %1562 = vmatpush1.msra.mxu0 0.0
    %1563 = vmatprep.subr.mxu0 0.0
    %1564 = vmatpush1.msra.mxu0 0.0
    %1565 = vmatprep.mubr.f32.mxu0 0.0
    %1566 = vmatmul.mubr.f32.gmra.mrb[0].mxu0 %v1500
    %v1567 = vpop.f32.mrb[0].mxu0
    %v1568 = vadd.f32 0.0, %v1567
    %v1569 = vpop.f32.mrb[0].mxu0
    %v1570 = vadd.f32 0.0, %v1569
    %1571 = vdwg.mxu0
    %1572 = vmatprep.subr.mxu0 0.0
    %1573 = vmatpush1.msra.mxu0 %v321
    %1574 = vmatprep.subr.mxu0 0.0
    %1575 = vmatpush1.msra.mxu0 %v324
    %1576 = vmatprep.subr.mxu0 0.0
    %1577 = vmatpush1.msra.mxu0 %v327
    %1578 = vmatprep.subr.mxu0 0.0
    %1579 = vmatpush1.msra.mxu0 %v330
    %1580 = vmatprep.subr.mxu0 0.0
    %1581 = vmatpush1.msra.mxu0 %v333
    %1582 = vmatprep.subr.mxu0 0.0
    %1583 = vmatpush1.msra.mxu0 %v336
    %1584 = vmatprep.subr.mxu0 0.0
    %1585 = vmatpush1.msra.mxu0 %v339
    %1586 = vmatprep.subr.mxu0 0.0
    %1587 = vmatpush1.msra.mxu0 %v342
    %1588 = vmatprep.subr.mxu0 0.0
    %1589 = vmatpush1.msra.mxu0 %v345
    %1590 = vmatprep.subr.mxu0 0.0
    %1591 = vmatpush1.msra.mxu0 %v348
    %1592 = vmatprep.subr.mxu0 0.0
    %1593 = vmatpush1.msra.mxu0 %v351
    %1594 = vmatprep.subr.mxu0 0.0
    %1595 = vmatpush1.msra.mxu0 %v354
    %1596 = vmatprep.subr.mxu0 0.0
    %1597 = vmatpush1.msra.mxu0 %v357
    %1598 = vmatprep.subr.mxu0 0.0
    %1599 = vmatpush1.msra.mxu0 %v360
    %1600 = vmatprep.subr.mxu0 0.0
    %1601 = vmatpush1.msra.mxu0 %v363
    %1602 = vmatprep.subr.mxu0 0.0
    %1603 = vmatpush1.msra.mxu0 %v366
    %1604 = vmatprep.subr.mxu0 0.0
    %1605 = vmatpush1.msra.mxu0 0.0
    %1606 = vmatprep.subr.mxu0 0.0
    %1607 = vmatpush1.msra.mxu0 0.0
    %1608 = vmatprep.subr.mxu0 0.0
    %1609 = vmatpush1.msra.mxu0 0.0
    %1610 = vmatprep.subr.mxu0 0.0
    %1611 = vmatpush1.msra.mxu0 0.0
    %1612 = vmatprep.subr.mxu0 0.0
    %1613 = vmatpush1.msra.mxu0 0.0
    %1614 = vmatprep.subr.mxu0 0.0
    %1615 = vmatpush1.msra.mxu0 0.0
    %1616 = vmatprep.subr.mxu0 0.0
    %1617 = vmatpush1.msra.mxu0 0.0
    %1618 = vmatprep.subr.mxu0 0.0
    %1619 = vmatpush1.msra.mxu0 0.0
    %1620 = vmatprep.subr.mxu0 0.0
    %1621 = vmatpush1.msra.mxu0 0.0
    %1622 = vmatprep.subr.mxu0 0.0
    %1623 = vmatpush1.msra.mxu0 0.0
    %1624 = vmatprep.subr.mxu0 0.0
    %1625 = vmatpush1.msra.mxu0 0.0
    %1626 = vmatprep.subr.mxu0 0.0
    %1627 = vmatpush1.msra.mxu0 0.0
    %1628 = vmatprep.subr.mxu0 0.0
    %1629 = vmatpush1.msra.mxu0 0.0
    %1630 = vmatprep.subr.mxu0 0.0
    %1631 = vmatpush1.msra.mxu0 0.0
    %1632 = vmatprep.subr.mxu0 0.0
    %1633 = vmatpush1.msra.mxu0 0.0
    %1634 = vmatprep.subr.mxu0 0.0
    %1635 = vmatpush1.msra.mxu0 0.0
    %1636 = vmatprep.mubr.f32.mxu0 0.0
    %1637 = vmatmul.mubr.f32.gmra.mrb[0].mxu0 %v1500
    %v1638 = vpop.f32.mrb[0].mxu0
    %v1639 = vadd.f32 0.0, %v1638
    %v1640 = vpop.f32.mrb[0].mxu0
    %1641 = vdwg.mxu0
    %v1642 = vadd.f32 %v210, %v1568
    %v1643 = vadd.f32 %v212, %v1570
    %v1644 = vxor.u32 %v1642, 2147483648
    %v1645 = vmul.f32 %v1644, 1.442695
    %v1646 = vpow.pop %v1645
    %v1647 = vadd.f32 %v1646, 1.0
    %v1648 = vrcp.pop %v1647
    %v1649 = vmul.f32 1.0, %v1648
    %v1650 = vxor.u32 %v1643, 2147483648
    %v1651 = vmul.f32 %v1650, 1.442695
    %v1652 = vpow.pop %v1651
    %v1653 = vadd.f32 %v1652, 1.0
    %v1654 = vrcp.pop %v1653
    %v1655 = vmul.f32 1.0, %v1654
    %v1656 = vmul.f32 %v1649, %v1639
    %v1657 = vadd.f32 %v316, %v1656
    %v1658 = vtanh.pop %v1657
    %v1659 = vsub.f32 1.0, %v1655
    %v1660 = vmul.f32 %v1659, %v1658
    %v1661 = vmul.f32 %v1655, %v1500
    %v1662 = vadd.f32 %v1660, %v1661
    %1663 = vst [vmem:[#allocation8] sm:$0xff] %v1662
    // Predicated region
    $region26: #{tpu_custom_call.1} parent=1 // pred_check
      _
    $region27: #{tpu_custom_call.1} parent=1 // pred_check_branch
      %1665 = sbr.rel (0) target = $region29
    $region28: #{tpu_custom_call.1} parent=1 // pred_region
      %s1667 = ssub.s32 128, 128
      %1668 = vsyncadd [#allocation4], %s1667
      %s1670 = sshll.u32 [#allocation8], 4
      %s1671 = int_to_ptr.vmem [resolvable:$true] %s1670
      %1673 = dma.vmem_to_hbm [thread:$0]  %s1671, 128, %s3, [#allocation4]
    $region29: #{tpu_custom_call.1} parent=1 // pred_fallthru
      _
    // Predicated region
    $region30: #{tpu_custom_call.1} parent=1 // pred_check
      _
    $region31: #{tpu_custom_call.1} parent=1 // pred_check_branch
      %1675 = sbr.rel (0) target = $region33
    $region32: #{tpu_custom_call.1} parent=1 // pred_region
      %1676 = dma.done [#allocation4], 128
    $region33: #{tpu_custom_call.1} parent=1 // pred_fallthru
      _
    %1677 = vsyncpa [#allocation3], 1
    %1678 = vsyncpa [#allocation6], 1
    %1679 = vsyncpa [#allocation4], 1

</llo_original>
